<compile_context>
chip_gen: v7x
topology: tpu7x:2x2x1
jax: 0.10.0
libtpu: 0.0.40
codegen_flags: <defaults>
</compile_context>

<pallas_src>
import jax
import jax.numpy as jnp
from jax import lax
from jax.experimental import pallas as pl
from jax.experimental.pallas import tpu as pltpu


def _attention_kernel(x_ref, enc_ref, bias_ref, w_in_t_ref, w_out_a_t_ref,
                      w_out_b_t_ref, out_ref, attn_ref):
    """One grid step = `block_b` batch elements, batch-major blocks.

    x_ref:         (Bb, T, D_in)   activations (bf16)
    enc_ref:       (Bb, S, D_src)  encoder outputs (bf16)
    bias_ref:      (Bb, 1, S)      additive mask bias (0 keep / -inf padded), f32
    w_in_t_ref:    (D_in, D_src)   input_proj weight, pre-transposed
    w_out_a_t_ref: (D_src, D_out)  output_proj slice for the attended context
    w_out_b_t_ref: (D_in, D_out)   output_proj slice for the raw inputs
    out_ref:       (Bb, T, D_out)  f32, batch-major
    attn_ref:      (Bb, T, S)      f32
    """
    bb, t, d_in = x_ref.shape
    d_src = enc_ref.shape[2]
    d_out = out_ref.shape[2]
    mxu_dt = x_ref.dtype

    x = x_ref[...]                                    # (Bb, T, D_in)
    enc = enc_ref[...]                                # (Bb, S, D_src)
    x2 = x.reshape(bb * t, d_in)                      # leading-dim flatten (layout-preserving)

    # input_proj over all Bb*T rows as ONE MXU matmul (instead of bb tiny (T,D)x(D,D) dots).
    xp = jnp.dot(x2, w_in_t_ref[...], preferred_element_type=jnp.float32)   # (Bb*T, D_src)

    # attention scores: one batched dot over the block batch dim, bf16 MXU inputs.
    sc = lax.dot_general(
        xp.reshape(bb, t, d_src).astype(mxu_dt), enc,
        dimension_numbers=(((2,), (2,)), ((0,), (0,))),
        preferred_element_type=jnp.float32)                                  # (Bb, T, S)

    # masked_fill(-inf) as an additive bias; softmax over source positions in f32.
    # Fully-padded rows intentionally become NaN (matches PyTorch semantics exactly).
    sc = sc + bias_ref[...]
    m = jnp.max(sc, axis=-1, keepdims=True)
    e = jnp.exp(sc - m)
    p = e * pl.reciprocal(jnp.sum(e, axis=-1, keepdims=True), approx=True)
    # NOTE: with S < 128 this is a masked (partial-lane) store; lane-pad in the wrapper if
    # the attn writeback ever becomes the bottleneck.
    attn_ref[...] = p.astype(attn_ref.dtype)

    # context: batched (Bb,T,S) @ (Bb,S,D_src); probabilities fed to the MXU in bf16.
    ctx = lax.dot_general(
        p.astype(mxu_dt), enc,
        dimension_numbers=(((2,), (1,)), ((0,), (0,))),
        preferred_element_type=jnp.float32)                                  # (Bb, T, D_src)

    # output_proj(concat([ctx, x])) == ctx @ Wa^T + x @ Wb^T, fused over Bb*T rows.
    o = (jnp.dot(ctx.reshape(bb * t, d_src).astype(mxu_dt), w_out_a_t_ref[...],
                 preferred_element_type=jnp.float32)
         + jnp.dot(x2, w_out_b_t_ref[...], preferred_element_type=jnp.float32))
    out_ref[...] = jnp.tanh(o).reshape(bb, t, d_out).astype(out_ref.dtype)


def attention_layer(inputs, encoder_outputs, encoder_padding_mask, w_in, w_out,
                    *, block_b=None, activation_dtype=jnp.bfloat16):
    """inputs: (T, B, D_in), encoder_outputs: (S, B, D_src), encoder_padding_mask: (S, B)
    bool. w_in: (D_src, D_in), w_out: (D_out, D_in + D_src) in PyTorch Linear layout.
    Returns (out (T, B, D_out), attn (B, T, S)), matching AttentionLayer.forward."""
    T, B, D_in = inputs.shape
    S, B2, D_src = encoder_outputs.shape
    D_out = w_out.shape[0]
    assert B2 == B
    assert w_in.shape == (D_src, D_in)
    assert w_out.shape == (D_out, D_in + D_src)

    act_dt = jnp.dtype(activation_dtype)
    f32 = jnp.float32

    # Batch-major activations (one XLA HBM transpose per input — far cheaper than per-batch
    # sublane-strided slices/stores inside the kernel); bf16 on the MXU, f32 accumulation.
    x = jnp.transpose(inputs, (1, 0, 2)).astype(act_dt)               # (B, T, D_in)
    enc = jnp.transpose(encoder_outputs, (1, 0, 2)).astype(act_dt)    # (B, S, D_src)
    # Padding mask -> additive 0/-inf bias (keeps masked_fill(-inf)+softmax semantics).
    bias = jnp.where(encoder_padding_mask.T, -jnp.inf, 0.0).astype(f32).reshape(B, 1, S)

    # Weight transposes + w_out split hoisted to the wrapper (no concat / .T in-kernel).
    w_in_t = w_in.T.astype(act_dt)                   # (D_in, D_src)
    w_out_a_t = w_out[:, :D_src].T.astype(act_dt)    # (D_src, D_out) attended-context part
    w_out_b_t = w_out[:, D_src:].T.astype(act_dt)    # (D_in, D_out)  raw-input part

    # ---- generation-aware VMEM sizing -------------------------------------------------
    try:
        vmem_cap = int(pltpu.get_tpu_info().vmem_capacity_bytes)
    except Exception:
        vmem_cap = 64 * 1024 * 1024          # conservative: v7x per-TensorCore VMEM

    a_elt = act_dt.itemsize
    # Per batch element per step: pipelined I/O (double-buffered) + f32 live intermediates
    # (xp, scores, probs, ctx) kept in VMEM/vregs by the compiler.
    per_b_io = (T * D_in + S * D_src) * a_elt + S * 4 + (T * D_out + T * S) * 4
    per_b_live = (2 * T * D_src + 2 * T * S) * 4
    per_b_bytes = 2 * per_b_io + per_b_live
    w_bytes = (D_in * D_src + D_src * D_out + D_in * D_out) * a_elt

    act_budget = max(vmem_cap // 16, 1 << 20)   # ~8 MiB on 128 MiB parts, ~4 MiB on v7x

    if block_b is None:
        divisors = [d for d in range(1, B + 1) if B % d == 0]
        fitting = [d for d in divisors if d * per_b_bytes <= act_budget]
        block_b = max(fitting) if fitting else 1
        # Keep >= 2 grid steps so megacore sharding / v7x's two TensorCores both get work.
        if B >= 2 and block_b == B:
            block_b = max(d for d in divisors if d < B)
    assert B % block_b == 0
    nb = B // block_b
    # TODO(synk): for very long T/S add a parallel T grid axis and an online-softmax S
    # tiling instead of keeping the whole (T, S) score tile resident per grid step.

    compiler_kwargs = dict(dimension_semantics=("parallel",))
    vmem_est = block_b * per_b_bytes + 2 * w_bytes
    if vmem_est > 24 * 1024 * 1024:
        compiler_kwargs["vmem_limit_bytes"] = int(
            min(max(vmem_est * 5 // 4, 32 * 1024 * 1024), vmem_cap * 3 // 4))

    # ---- pallas_call -------------------------------------------------------------------
    def build(single_buffer_weights):
        w_kw = {"pipeline_mode": pl.Buffered(1)} if single_buffer_weights else {}
        return pl.pallas_call(
            _attention_kernel,
            out_shape=(
                jax.ShapeDtypeStruct((B, T, D_out), f32),
                jax.ShapeDtypeStruct((B, T, S), f32),
            ),
            grid_spec=pltpu.PrefetchScalarGridSpec(
                num_scalar_prefetch=0,
                grid=(nb,),
                in_specs=[
                    pl.BlockSpec((block_b, T, D_in), lambda g: (g, 0, 0)),
                    pl.BlockSpec((block_b, S, D_src), lambda g: (g, 0, 0)),
                    pl.BlockSpec((block_b, 1, S), lambda g: (g, 0, 0)),
                    pl.BlockSpec((D_in, D_src), lambda g: (0, 0), **w_kw),
                    pl.BlockSpec((D_src, D_out), lambda g: (0, 0), **w_kw),
                    pl.BlockSpec((D_in, D_out), lambda g: (0, 0), **w_kw),
                ],
                out_specs=[
                    pl.BlockSpec((block_b, T, D_out), lambda g: (g, 0, 0)),
                    pl.BlockSpec((block_b, T, S), lambda g: (g, 0, 0)),
                ],
            ),
            compiler_params=pltpu.CompilerParams(**compiler_kwargs),
        )

    args = (x, enc, bias, w_in_t, w_out_a_t, w_out_b_t)
    try:
        out_bm, attn = build(True)(*args)
    except Exception:
        # TODO(synk): drop this fallback once pl.Buffered(1) single-buffering of the
        # grid-constant weight blocks is confirmed on every deployed jax/Mosaic version.
        out_bm, attn = build(False)(*args)

    # Back to the module's time-major output layout (single XLA HBM transpose).
    return jnp.transpose(out_bm, (1, 0, 2)), attn


def _reference(inputs, encoder_outputs, encoder_padding_mask, w_in, w_out):
    # plain-JAX (f32) re-implementation of the PyTorch forward, for verification
    x = jnp.transpose(inputs, (1, 0, 2))
    enc = jnp.transpose(encoder_outputs, (1, 0, 2))
    mask = jnp.transpose(encoder_padding_mask, (1, 0))
    xp = jnp.einsum("btd,sd->bts", x, w_in)
    scores = jnp.einsum("bts,bks->btk", xp, enc)
    scores = jnp.where(mask[:, None, :], -jnp.inf, scores)
    p = jax.nn.softmax(scores, axis=-1)
    ctx = jnp.einsum("btk,bks->bts", p, enc)
    cat = jnp.concatenate([ctx, x], axis=-1)
    out = jnp.tanh(jnp.einsum("btc,oc->bto", cat, w_out))
    return jnp.transpose(out, (1, 0, 2)), p


if __name__ == "__main__":
    key = jax.random.PRNGKey(0)
    T, S, B = 8, 16, 2
    D_in, D_src, D_out = 32, 32, 32

    k1, k2, k3, k4 = jax.random.split(key, 4)
    inputs = jax.random.normal(k1, (T, B, D_in), dtype=jnp.float32)
    encoder_outputs = jax.random.normal(k2, (S, B, D_src), dtype=jnp.float32)
    # pad out the last few source positions for each batch element
    src_lens = jnp.array([S - 3, S - 5], dtype=jnp.int32)
    encoder_padding_mask = jnp.arange(S)[:, None] >= src_lens[None, :]     # (S, B) bool

    # deterministic "Linear" weights (bias=False), PyTorch layout (out_features, in_features)
    w_in = 0.1 * jax.random.normal(k3, (D_src, D_in), dtype=jnp.float32)
    w_out = 0.1 * jax.random.normal(k4, (D_out, D_in + D_src), dtype=jnp.float32)

    out, attn = attention_layer(inputs, encoder_outputs, encoder_padding_mask, w_in, w_out)
    out = jax.block_until_ready(out)
    attn = jax.block_until_ready(attn)

    ref_out, ref_attn = _reference(inputs, encoder_outputs, encoder_padding_mask, w_in, w_out)
    assert out.shape == (T, B, D_out) and attn.shape == (B, T, S)
    # bf16 MXU inputs (f32 accumulation) + approx reciprocal -> looser tolerance vs f32 ref
    assert jnp.allclose(out, ref_out, atol=7.5e-2, rtol=5e-2)
    assert jnp.allclose(attn, ref_attn, atol=7.5e-2, rtol=5e-2)

    print("KERNEL_OK")
</pallas_src>

<mosaic_0001>
module attributes {stable_mosaic.version = 11 : i64} {
  func.func @_attention_kernel(%arg0: i32, %arg1: memref<1x8x32xbf16, #tpu.memory_space<vmem>>, %arg2: memref<1x16x32xbf16, #tpu.memory_space<vmem>>, %arg3: memref<1x1x16xf32, #tpu.memory_space<vmem>>, %arg4: memref<32x32xbf16, #tpu.memory_space<vmem>>, %arg5: memref<32x32xbf16, #tpu.memory_space<vmem>>, %arg6: memref<32x32xbf16, #tpu.memory_space<vmem>>, %arg7: memref<1x8x32xf32, #tpu.memory_space<vmem>>, %arg8: memref<1x8x16xf32, #tpu.memory_space<vmem>>) attributes {dimension_semantics = [#tpu.dimension_semantics<parallel>], iteration_bounds = array<i64: 2>, scalar_prefetch = 0 : i64, scratch_operands = 0 : i64, tpu.core_type = #tpu.core_type<tc>, window_params = [{transform_indices = @transform_0, window_bounds = array<i64: 1, 8, 32>}, {transform_indices = @transform_1, window_bounds = array<i64: 1, 16, 32>}, {transform_indices = @transform_2, window_bounds = array<i64: 1, 1, 16>}, {pipeline_mode = #tpu.pipeline_mode<synchronous>, transform_indices = @transform_3, window_bounds = array<i64: 32, 32>}, {pipeline_mode = #tpu.pipeline_mode<synchronous>, transform_indices = @transform_4, window_bounds = array<i64: 32, 32>}, {pipeline_mode = #tpu.pipeline_mode<synchronous>, transform_indices = @transform_5, window_bounds = array<i64: 32, 32>}, {transform_indices = @transform_6, window_bounds = array<i64: 1, 8, 32>}, {transform_indices = @transform_7, window_bounds = array<i64: 1, 8, 16>}]} {
    %c0 = arith.constant 0 : index
    %c0_0 = arith.constant 0 : index
    %c0_1 = arith.constant 0 : index
    %0 = vector.load %arg1[%c0, %c0_0, %c0_1] : memref<1x8x32xbf16, #tpu.memory_space<vmem>>, vector<1x8x32xbf16>
    %c0_2 = arith.constant 0 : index
    %c0_3 = arith.constant 0 : index
    %c0_4 = arith.constant 0 : index
    %1 = vector.load %arg2[%c0_2, %c0_3, %c0_4] : memref<1x16x32xbf16, #tpu.memory_space<vmem>>, vector<1x16x32xbf16>
    %2 = vector.shape_cast %0 : vector<1x8x32xbf16> to vector<8x32xbf16>
    %c0_5 = arith.constant 0 : index
    %c0_6 = arith.constant 0 : index
    %3 = vector.load %arg4[%c0_5, %c0_6] : memref<32x32xbf16, #tpu.memory_space<vmem>>, vector<32x32xbf16>
    %cst = arith.constant dense<0.000000e+00> : vector<8x32xf32>
    %4 = tpu.matmul %2, %3, %cst {dimension_numbers = #tpu.dot_dimension_numbers<[1], [0], [0], [1], [0, 0, 1, 1], [], []>} : vector<8x32xbf16>, vector<32x32xbf16>, vector<8x32xf32> -> vector<8x32xf32>
    %5 = vector.shape_cast %4 : vector<8x32xf32> to vector<1x8x32xf32>
    %6 = arith.truncf %5 : vector<1x8x32xf32> to vector<1x8x32xbf16>
    %cst_7 = arith.constant dense<0.000000e+00> : vector<1x8x16xf32>
    %7 = tpu.matmul %6, %1, %cst_7 {dimension_numbers = #tpu.dot_dimension_numbers<[2], [2], [1], [1], [0, 0, 0, 1, 1, 1], [0], [0]>} : vector<1x8x32xbf16>, vector<1x16x32xbf16>, vector<1x8x16xf32> -> vector<1x8x16xf32>
    %c0_8 = arith.constant 0 : index
    %c0_9 = arith.constant 0 : index
    %c0_10 = arith.constant 0 : index
    %8 = vector.load %arg3[%c0_8, %c0_9, %c0_10] : memref<1x1x16xf32, #tpu.memory_space<vmem>>, vector<1x1x16xf32>
    %9 = vector.broadcast %8 : vector<1x1x16xf32> to vector<1x8x16xf32>
    %10 = arith.addf %7, %9 : vector<1x8x16xf32>
    %cst_11 = arith.constant dense<0xFF800000> : vector<1x8xf32>
    %11 = vector.multi_reduction <maximumf>, %10, %cst_11 [2] : vector<1x8x16xf32> to vector<1x8xf32>
    %12 = vector.shape_cast %11 : vector<1x8xf32> to vector<1x8x1xf32>
    %13 = vector.broadcast %12 : vector<1x8x1xf32> to vector<1x8x16xf32>
    %14 = arith.subf %10, %13 : vector<1x8x16xf32>
    %15 = math.exp %14 : vector<1x8x16xf32>
    %cst_12 = arith.constant dense<0.000000e+00> : vector<1x8xf32>
    %16 = vector.multi_reduction <add>, %15, %cst_12 [2] : vector<1x8x16xf32> to vector<1x8xf32>
    %17 = vector.shape_cast %16 : vector<1x8xf32> to vector<1x8x1xf32>
    %18 = tpu.reciprocal %17 {approx = true} : vector<1x8x1xf32> -> vector<1x8x1xf32>
    %19 = vector.broadcast %18 : vector<1x8x1xf32> to vector<1x8x16xf32>
    %20 = arith.mulf %15, %19 : vector<1x8x16xf32>
    %c0_13 = arith.constant 0 : index
    %c0_14 = arith.constant 0 : index
    %c0_15 = arith.constant 0 : index
    %21 = vector.load %arg8[%c0_13, %c0_14, %c0_15] : memref<1x8x16xf32, #tpu.memory_space<vmem>>, vector<1x8x16xf32>
    tpu.vector_store %arg8[%c0_13, %c0_14, %c0_15], %20 {strides = array<i32>} : memref<1x8x16xf32, #tpu.memory_space<vmem>>, vector<1x8x16xf32>,
    %22 = arith.truncf %20 : vector<1x8x16xf32> to vector<1x8x16xbf16>
    %cst_16 = arith.constant dense<0.000000e+00> : vector<1x8x32xf32>
    %23 = tpu.matmul %22, %1, %cst_16 {dimension_numbers = #tpu.dot_dimension_numbers<[2], [1], [1], [2], [0, 0, 0, 1, 1, 2], [0], [0]>} : vector<1x8x16xbf16>, vector<1x16x32xbf16>, vector<1x8x32xf32> -> vector<1x8x32xf32>
    %24 = vector.shape_cast %23 : vector<1x8x32xf32> to vector<8x32xf32>
    %25 = arith.truncf %24 : vector<8x32xf32> to vector<8x32xbf16>
    %c0_17 = arith.constant 0 : index
    %c0_18 = arith.constant 0 : index
    %26 = vector.load %arg5[%c0_17, %c0_18] : memref<32x32xbf16, #tpu.memory_space<vmem>>, vector<32x32xbf16>
    %cst_19 = arith.constant dense<0.000000e+00> : vector<8x32xf32>
    %27 = tpu.matmul %25, %26, %cst_19 {dimension_numbers = #tpu.dot_dimension_numbers<[1], [0], [0], [1], [0, 0, 1, 1], [], []>} : vector<8x32xbf16>, vector<32x32xbf16>, vector<8x32xf32> -> vector<8x32xf32>
    %c0_20 = arith.constant 0 : index
    %c0_21 = arith.constant 0 : index
    %28 = vector.load %arg6[%c0_20, %c0_21] : memref<32x32xbf16, #tpu.memory_space<vmem>>, vector<32x32xbf16>
    %cst_22 = arith.constant dense<0.000000e+00> : vector<8x32xf32>
    %29 = tpu.matmul %2, %28, %cst_22 {dimension_numbers = #tpu.dot_dimension_numbers<[1], [0], [0], [1], [0, 0, 1, 1], [], []>} : vector<8x32xbf16>, vector<32x32xbf16>, vector<8x32xf32> -> vector<8x32xf32>
    %30 = arith.addf %27, %29 : vector<8x32xf32>
    %31 = math.tanh %30 : vector<8x32xf32>
    %32 = vector.shape_cast %31 : vector<8x32xf32> to vector<1x8x32xf32>
    %c0_23 = arith.constant 0 : index
    %c0_24 = arith.constant 0 : index
    %c0_25 = arith.constant 0 : index
    %33 = vector.load %arg7[%c0_23, %c0_24, %c0_25] : memref<1x8x32xf32, #tpu.memory_space<vmem>>, vector<1x8x32xf32>
    tpu.vector_store %arg7[%c0_23, %c0_24, %c0_25], %32 {strides = array<i32>} : memref<1x8x32xf32, #tpu.memory_space<vmem>>, vector<1x8x32xf32>,
    return
  }
  func.func @transform_0(%arg0: i32) -> (i32, i32, i32) {
    %c0_i32 = arith.constant 0 : i32
    %c0_i32_0 = arith.constant 0 : i32
    %c0_i32_1 = arith.constant 0 : i32
    return %arg0, %c0_i32, %c0_i32_0 : i32, i32, i32
  }
  func.func @transform_1(%arg0: i32) -> (i32, i32, i32) {
    %c0_i32 = arith.constant 0 : i32
    %c0_i32_0 = arith.constant 0 : i32
    %c0_i32_1 = arith.constant 0 : i32
    return %arg0, %c0_i32, %c0_i32_0 : i32, i32, i32
  }
  func.func @transform_2(%arg0: i32) -> (i32, i32, i32) {
    %c0_i32 = arith.constant 0 : i32
    %c0_i32_0 = arith.constant 0 : i32
    %c0_i32_1 = arith.constant 0 : i32
    return %arg0, %c0_i32, %c0_i32_0 : i32, i32, i32
  }
  func.func @transform_3(%arg0: i32) -> (i32, i32) {
    %c0_i32 = arith.constant 0 : i32
    %c0_i32_0 = arith.constant 0 : i32
    %c0_i32_1 = arith.constant 0 : i32
    return %c0_i32, %c0_i32_0 : i32, i32
  }
  func.func @transform_4(%arg0: i32) -> (i32, i32) {
    %c0_i32 = arith.constant 0 : i32
    %c0_i32_0 = arith.constant 0 : i32
    %c0_i32_1 = arith.constant 0 : i32
    return %c0_i32, %c0_i32_0 : i32, i32
  }
  func.func @transform_5(%arg0: i32) -> (i32, i32) {
    %c0_i32 = arith.constant 0 : i32
    %c0_i32_0 = arith.constant 0 : i32
    %c0_i32_1 = arith.constant 0 : i32
    return %c0_i32, %c0_i32_0 : i32, i32
  }
  func.func @transform_6(%arg0: i32) -> (i32, i32, i32) {
    %c0_i32 = arith.constant 0 : i32
    %c0_i32_0 = arith.constant 0 : i32
    %c0_i32_1 = arith.constant 0 : i32
    return %arg0, %c0_i32, %c0_i32_0 : i32, i32, i32
  }
  func.func @transform_7(%arg0: i32) -> (i32, i32, i32) {
    %c0_i32 = arith.constant 0 : i32
    %c0_i32_0 = arith.constant 0 : i32
    %c0_i32_1 = arith.constant 0 : i32
    return %arg0, %c0_i32, %c0_i32_0 : i32, i32, i32
  }
}

module attributes {stable_mosaic.version = 11 : i64} {
  func.func @_attention_kernel(%arg0: i32, %arg1: memref<1x8x32xbf16, #tpu.memory_space<vmem>>, %arg2: memref<1x16x32xbf16, #tpu.memory_space<vmem>>, %arg3: memref<1x1x16xf32, #tpu.memory_space<vmem>>, %arg4: memref<32x32xbf16, #tpu.memory_space<vmem>>, %arg5: memref<32x32xbf16, #tpu.memory_space<vmem>>, %arg6: memref<32x32xbf16, #tpu.memory_space<vmem>>, %arg7: memref<1x8x32xf32, #tpu.memory_space<vmem>>, %arg8: memref<1x8x16xf32, #tpu.memory_space<vmem>>) attributes {dimension_semantics = [#tpu.dimension_semantics<parallel>], iteration_bounds = array<i64: 2>, scalar_prefetch = 0 : i64, scratch_operands = 0 : i64, tpu.core_type = #tpu.core_type<tc>, window_params = [{transform_indices = @transform_0, window_bounds = array<i64: 1, 8, 32>}, {transform_indices = @transform_1, window_bounds = array<i64: 1, 16, 32>}, {transform_indices = @transform_2, window_bounds = array<i64: 1, 1, 16>}, {pipeline_mode = #tpu.pipeline_mode<synchronous>, transform_indices = @transform_3, window_bounds = array<i64: 32, 32>}, {pipeline_mode = #tpu.pipeline_mode<synchronous>, transform_indices = @transform_4, window_bounds = array<i64: 32, 32>}, {pipeline_mode = #tpu.pipeline_mode<synchronous>, transform_indices = @transform_5, window_bounds = array<i64: 32, 32>}, {transform_indices = @transform_6, window_bounds = array<i64: 1, 8, 32>}, {transform_indices = @transform_7, window_bounds = array<i64: 1, 8, 16>}]} {
    %c0 = arith.constant 0 : index
    %c0_0 = arith.constant 0 : index
    %c0_1 = arith.constant 0 : index
    %0 = vector.load %arg1[%c0, %c0_0, %c0_1] : memref<1x8x32xbf16, #tpu.memory_space<vmem>>, vector<1x8x32xbf16>
    %c0_2 = arith.constant 0 : index
    %c0_3 = arith.constant 0 : index
    %c0_4 = arith.constant 0 : index
    %1 = vector.load %arg2[%c0_2, %c0_3, %c0_4] : memref<1x16x32xbf16, #tpu.memory_space<vmem>>, vector<1x16x32xbf16>
    %2 = vector.shape_cast %0 : vector<1x8x32xbf16> to vector<8x32xbf16>
    %c0_5 = arith.constant 0 : index
    %c0_6 = arith.constant 0 : index
    %3 = vector.load %arg4[%c0_5, %c0_6] : memref<32x32xbf16, #tpu.memory_space<vmem>>, vector<32x32xbf16>
    %cst = arith.constant dense<0.000000e+00> : vector<8x32xf32>
    %4 = tpu.matmul %2, %3, %cst {dimension_numbers = #tpu.dot_dimension_numbers<[1], [0], [0], [1], [0, 0, 1, 1], [], []>} : vector<8x32xbf16>, vector<32x32xbf16>, vector<8x32xf32> -> vector<8x32xf32>
    %5 = vector.shape_cast %4 : vector<8x32xf32> to vector<1x8x32xf32>
    %6 = arith.truncf %5 : vector<1x8x32xf32> to vector<1x8x32xbf16>
    %cst_7 = arith.constant dense<0.000000e+00> : vector<1x8x16xf32>
    %7 = tpu.matmul %6, %1, %cst_7 {dimension_numbers = #tpu.dot_dimension_numbers<[2], [2], [1], [1], [0, 0, 0, 1, 1, 1], [0], [0]>} : vector<1x8x32xbf16>, vector<1x16x32xbf16>, vector<1x8x16xf32> -> vector<1x8x16xf32>
    %c0_8 = arith.constant 0 : index
    %c0_9 = arith.constant 0 : index
    %c0_10 = arith.constant 0 : index
    %8 = vector.load %arg3[%c0_8, %c0_9, %c0_10] : memref<1x1x16xf32, #tpu.memory_space<vmem>>, vector<1x1x16xf32>
    %9 = vector.broadcast %8 : vector<1x1x16xf32> to vector<1x8x16xf32>
    %10 = arith.addf %7, %9 : vector<1x8x16xf32>
    %cst_11 = arith.constant dense<0xFF800000> : vector<1x8xf32>
    %11 = vector.multi_reduction <maximumf>, %10, %cst_11 [2] : vector<1x8x16xf32> to vector<1x8xf32>
    %12 = vector.shape_cast %11 : vector<1x8xf32> to vector<1x8x1xf32>
    %13 = vector.broadcast %12 : vector<1x8x1xf32> to vector<1x8x16xf32>
    %14 = arith.subf %10, %13 : vector<1x8x16xf32>
    %15 = math.exp %14 : vector<1x8x16xf32>
    %cst_12 = arith.constant dense<0.000000e+00> : vector<1x8xf32>
    %16 = vector.multi_reduction <add>, %15, %cst_12 [2] : vector<1x8x16xf32> to vector<1x8xf32>
    %17 = vector.shape_cast %16 : vector<1x8xf32> to vector<1x8x1xf32>
    %18 = tpu.reciprocal %17 {approx = true} : vector<1x8x1xf32> -> vector<1x8x1xf32>
    %19 = vector.broadcast %18 : vector<1x8x1xf32> to vector<1x8x16xf32>
    %20 = arith.mulf %15, %19 : vector<1x8x16xf32>
    %c0_13 = arith.constant 0 : index
    %c0_14 = arith.constant 0 : index
    %c0_15 = arith.constant 0 : index
    %21 = vector.load %arg8[%c0_13, %c0_14, %c0_15] : memref<1x8x16xf32, #tpu.memory_space<vmem>>, vector<1x8x16xf32>
    tpu.vector_store %arg8[%c0_13, %c0_14, %c0_15], %20 {strides = array<i32>} : memref<1x8x16xf32, #tpu.memory_space<vmem>>, vector<1x8x16xf32>,
    %22 = arith.truncf %20 : vector<1x8x16xf32> to vector<1x8x16xbf16>
    %cst_16 = arith.constant dense<0.000000e+00> : vector<1x8x32xf32>
    %23 = tpu.matmul %22, %1, %cst_16 {dimension_numbers = #tpu.dot_dimension_numbers<[2], [1], [1], [2], [0, 0, 0, 1, 1, 2], [0], [0]>} : vector<1x8x16xbf16>, vector<1x16x32xbf16>, vector<1x8x32xf32> -> vector<1x8x32xf32>
    %24 = vector.shape_cast %23 : vector<1x8x32xf32> to vector<8x32xf32>
    %25 = arith.truncf %24 : vector<8x32xf32> to vector<8x32xbf16>
    %c0_17 = arith.constant 0 : index
    %c0_18 = arith.constant 0 : index
    %26 = vector.load %arg5[%c0_17, %c0_18] : memref<32x32xbf16, #tpu.memory_space<vmem>>, vector<32x32xbf16>
    %cst_19 = arith.constant dense<0.000000e+00> : vector<8x32xf32>
    %27 = tpu.matmul %25, %26, %cst_19 {dimension_numbers = #tpu.dot_dimension_numbers<[1], [0], [0], [1], [0, 0, 1, 1], [], []>} : vector<8x32xbf16>, vector<32x32xbf16>, vector<8x32xf32> -> vector<8x32xf32>
    %c0_20 = arith.constant 0 : index
    %c0_21 = arith.constant 0 : index
    %28 = vector.load %arg6[%c0_20, %c0_21] : memref<32x32xbf16, #tpu.memory_space<vmem>>, vector<32x32xbf16>
    %cst_22 = arith.constant dense<0.000000e+00> : vector<8x32xf32>
    %29 = tpu.matmul %2, %28, %cst_22 {dimension_numbers = #tpu.dot_dimension_numbers<[1], [0], [0], [1], [0, 0, 1, 1], [], []>} : vector<8x32xbf16>, vector<32x32xbf16>, vector<8x32xf32> -> vector<8x32xf32>
    %30 = arith.addf %27, %29 : vector<8x32xf32>
    %31 = math.tanh %30 : vector<8x32xf32>
    %32 = vector.shape_cast %31 : vector<8x32xf32> to vector<1x8x32xf32>
    %c0_23 = arith.constant 0 : index
    %c0_24 = arith.constant 0 : index
    %c0_25 = arith.constant 0 : index
    %33 = vector.load %arg7[%c0_23, %c0_24, %c0_25] : memref<1x8x32xf32, #tpu.memory_space<vmem>>, vector<1x8x32xf32>
    tpu.vector_store %arg7[%c0_23, %c0_24, %c0_25], %32 {strides = array<i32>} : memref<1x8x32xf32, #tpu.memory_space<vmem>>, vector<1x8x32xf32>,
    return
  }
  func.func @transform_0(%arg0: i32) -> (i32, i32, i32) {
    %c0_i32 = arith.constant 0 : i32
    %c0_i32_0 = arith.constant 0 : i32
    %c0_i32_1 = arith.constant 0 : i32
    return %arg0, %c0_i32, %c0_i32_0 : i32, i32, i32
  }
  func.func @transform_1(%arg0: i32) -> (i32, i32, i32) {
    %c0_i32 = arith.constant 0 : i32
    %c0_i32_0 = arith.constant 0 : i32
    %c0_i32_1 = arith.constant 0 : i32
    return %arg0, %c0_i32, %c0_i32_0 : i32, i32, i32
  }
  func.func @transform_2(%arg0: i32) -> (i32, i32, i32) {
    %c0_i32 = arith.constant 0 : i32
    %c0_i32_0 = arith.constant 0 : i32
    %c0_i32_1 = arith.constant 0 : i32
    return %arg0, %c0_i32, %c0_i32_0 : i32, i32, i32
  }
  func.func @transform_3(%arg0: i32) -> (i32, i32) {
    %c0_i32 = arith.constant 0 : i32
    %c0_i32_0 = arith.constant 0 : i32
    %c0_i32_1 = arith.constant 0 : i32
    return %c0_i32, %c0_i32_0 : i32, i32
  }
  func.func @transform_4(%arg0: i32) -> (i32, i32) {
    %c0_i32 = arith.constant 0 : i32
    %c0_i32_0 = arith.constant 0 : i32
    %c0_i32_1 = arith.constant 0 : i32
    return %c0_i32, %c0_i32_0 : i32, i32
  }
  func.func @transform_5(%arg0: i32) -> (i32, i32) {
    %c0_i32 = arith.constant 0 : i32
    %c0_i32_0 = arith.constant 0 : i32
    %c0_i32_1 = arith.constant 0 : i32
    return %c0_i32, %c0_i32_0 : i32, i32
  }
  func.func @transform_6(%arg0: i32) -> (i32, i32, i32) {
    %c0_i32 = arith.constant 0 : i32
    %c0_i32_0 = arith.constant 0 : i32
    %c0_i32_1 = arith.constant 0 : i32
    return %arg0, %c0_i32, %c0_i32_0 : i32, i32, i32
  }
  func.func @transform_7(%arg0: i32) -> (i32, i32, i32) {
    %c0_i32 = arith.constant 0 : i32
    %c0_i32_0 = arith.constant 0 : i32
    %c0_i32_1 = arith.constant 0 : i32
    return %arg0, %c0_i32, %c0_i32_0 : i32, i32, i32
  }
}

</mosaic_0001>

<llo_original>
// kernel: tpu_custom_call.1
$region0: #{tpu_custom_call.1}
  #allocation0 [shape = 'u32[]', space=smem, size = 0x4, offset = 0x4, fixed_abs, tag = 'smem constant byte address 0x4 - core index']
  #allocation1 [shape = 'u32[144,128]{1,0:T(1,128)}', space=vmem, size = 0x12000, scoped, tag = 'internal scratch']
  %s0 = inlined_call_operand.hbm [shape: bf16[2,8,32], index: 0, kind: input, shape index: {}]
  %s1 = inlined_call_operand.hbm [shape: bf16[2,16,32], index: 1, kind: input, shape index: {}]
  %s2 = inlined_call_operand.vmem [shape: f32[2,1,16], index: 2, kind: input, shape index: {}]
  %s3 = inlined_call_operand.hbm [shape: bf16[32,32], index: 3, kind: input, shape index: {}]
  %s4 = inlined_call_operand.hbm [shape: bf16[32,32], index: 4, kind: input, shape index: {}]
  %s5 = inlined_call_operand.vmem [shape: bf16[32,32], index: 5, kind: input, shape index: {}]
  %s6 = inlined_call_operand.hbm [shape: f32[2,8,32], index: 6, kind: output, shape index: {0}]
  %s7 = inlined_call_operand.hbm [shape: f32[2,8,16], index: 7, kind: output, shape index: {1}]
  %8 = xla_tuple %s6, %s7
  %s9 = sld [smem:[#allocation0]]
  $region81: #{tpu_custom_call.1} parent=0
    _
  %s11 = ssub.s32 1, %s9
  %s12 = scalar_select 0, %s11, %s9
  $region1: #{tpu_custom_call.1} parent=0
    #allocation2 [shape = 'u8[4096]{0}', space=vmem, size = 0x1000, scoped, tag = 'input window, operand 0']
    #allocation3 [shape = 's32[2]{0}', space=sflag, size = 0x8, scoped, tag = 'scoped memory for tpu_custom_call.1']
    #allocation4 [shape = 's32[2]{0}', space=sflag, size = 0x8, scoped, tag = 'scoped memory for tpu_custom_call.1']
    #allocation5 [shape = 'u8[8192]{0}', space=vmem, size = 0x2000, scoped, tag = 'input window, operand 1']
    #allocation6 [shape = 's32[2]{0}', space=sflag, size = 0x8, scoped, tag = 'scoped memory for tpu_custom_call.1']
    #allocation7 [shape = 'u8[8192]{0}', space=vmem, size = 0x2000, scoped, tag = 'input window, operand 3, single buffered']
    #allocation8 [shape = 'u8[8192]{0}', space=vmem, size = 0x2000, scoped, tag = 'input window, operand 4, single buffered']
    #allocation9 [shape = 's32[1]{0}', space=sflag, size = 0x4, scoped, tag = 'scoped memory for tpu_custom_call.1']
    #allocation10 [shape = 'u8[8192]{0}', space=vmem, size = 0x2000, scoped, tag = 'output window, operand 0']
    #allocation11 [shape = 'u8[8192]{0}', space=vmem, size = 0x2000, scoped, tag = 'output window, operand 1']
    #allocation12 [shape = 's32[2]{0}', space=sflag, size = 0x8, scoped, tag = 'scoped memory for tpu_custom_call.1']
    %13 = vsyncpa [#allocation3], 0
    %s14 = scalar_lea.sflag [#allocation3], 1
    %15 = vsyncpa %s14, 0
    %16 = vsyncpa [#allocation6], 0
    %s17 = scalar_lea.sflag [#allocation6], 1
    %18 = vsyncpa %s17, 0
    %19 = vsyncpa [#allocation9], 0
    %20 = vsyncpa [#allocation4], 0
    %s21 = scalar_lea.sflag [#allocation4], 1
    %22 = vsyncpa %s21, 0
    %23 = vsyncpa [#allocation12], 0
    %s24 = scalar_lea.sflag [#allocation12], 1
    %25 = vsyncpa %s24, 0
    loop: start=0, step=1, limit=4
    $region2: #{tpu_custom_call.1} parent=1 // loop_pre_header
      _
    $region3: #{tpu_custom_call.1} parent=1 // loop_header
      %s27 = sphi 0, %s31
      %p28 = scmp.ge.s32.totalorder %s27, 4
      %s37 = sphi 0, %s39
      %s40 = sphi 0, %s37
      %s41 = sphi 0, %s40
      %s57 = sphi 0, %s41
      %s63 = sphi 0, %s65
      %s66 = sphi 0, %s63
      %s67 = sphi 0, %s66
      %s83 = sphi 0, %s67
      %s89 = sphi 0, %s91
      %s92 = sphi 0, %s89
      %s93 = sphi 0, %s92
      %s109 = sphi 0, %s93
      %s113 = sphi 0, %s113
      %s115 = sphi 0, %s113
      %s116 = sphi 0, %s115
      %s130 = sphi 0, %s116
      %s134 = sphi 0, %s134
      %s136 = sphi 0, %s134
      %s137 = sphi 0, %s136
      %s151 = sphi 0, %s137
      %s155 = sphi 0, %s155
      %s157 = sphi 0, %s155
      %s158 = sphi 0, %s157
      %s172 = sphi 0, %s158
      %s178 = sphi 0, %s180
      %s181 = sphi 0, %s178
      %s182 = sphi 0, %s181
      %s198 = sphi 0, %s182
      %s204 = sphi 0, %s206
      %s207 = sphi 0, %s204
      %s208 = sphi 0, %s207
      %s224 = sphi 0, %s208
    $region4: #{tpu_custom_call.1} parent=1 // loop_header_branch
      %30 = sbr.rel (%p28) target = $region8
    $region5: #{tpu_custom_call.1} parent=1 // loop_body
      %s32 = ssub.s32 %s27, 1
      %s33 = ssub.s32 %s27, 2
      %s34 = sadd.s32 %s27, 1
      %s35 = ssub.s32 %s27, %s34
      %p36 = scmp.eq.s32.totalorder %s35, 0
      %s38 = sadd.s32 %s37, 1
      %s39 = scalar_select %p36, %s37, %s38
      %p42 = pneg %p36
      %p43 = scmp.eq.s32.totalorder %s27, 1
      %p44 = por %p42, %p43
      %p45 = scmp.ne.s32.totalorder %s37, %s40
      %p46 = scmp.eq.s32.totalorder %s27, 0
      %p47 = por %p45, %p46
      %p48 = scmp.ne.s32.totalorder %s37, %s40
      %p49 = scmp.eq.s32.totalorder %s32, 1
      %p50 = por %p48, %p49
      %p51 = scmp.ne.s32.totalorder %s40, %s41
      %p52 = scmp.eq.s32.totalorder %s32, 0
      %p53 = por %p51, %p52
      %p54 = scmp.ne.s32.totalorder %s40, %s41
      %p55 = scmp.eq.s32.totalorder %s33, 1
      %p56 = por %p54, %p55
      %p58 = scmp.ne.s32.totalorder %s41, %s57
      %p59 = scmp.eq.s32.totalorder %s33, 0
      %p60 = por %p58, %p59
      %s61 = ssub.s32 %s27, %s34
      %p62 = scmp.eq.s32.totalorder %s61, 0
      %s64 = sadd.s32 %s63, 1
      %s65 = scalar_select %p62, %s63, %s64
      %p68 = pneg %p62
      %p69 = scmp.eq.s32.totalorder %s27, 1
      %p70 = por %p68, %p69
      %p71 = scmp.ne.s32.totalorder %s63, %s66
      %p72 = scmp.eq.s32.totalorder %s27, 0
      %p73 = por %p71, %p72
      %p74 = scmp.ne.s32.totalorder %s63, %s66
      %p75 = scmp.eq.s32.totalorder %s32, 1
      %p76 = por %p74, %p75
      %p77 = scmp.ne.s32.totalorder %s66, %s67
      %p78 = scmp.eq.s32.totalorder %s32, 0
      %p79 = por %p77, %p78
      %p80 = scmp.ne.s32.totalorder %s66, %s67
      %p81 = scmp.eq.s32.totalorder %s33, 1
      %p82 = por %p80, %p81
      %p84 = scmp.ne.s32.totalorder %s67, %s83
      %p85 = scmp.eq.s32.totalorder %s33, 0
      %p86 = por %p84, %p85
      %s87 = ssub.s32 %s27, %s34
      %p88 = scmp.eq.s32.totalorder %s87, 0
      %s90 = sadd.s32 %s89, 1
      %s91 = scalar_select %p88, %s89, %s90
      %p94 = pneg %p88
      %p95 = scmp.eq.s32.totalorder %s27, 1
      %p96 = por %p94, %p95
      %p97 = scmp.ne.s32.totalorder %s89, %s92
      %p98 = scmp.eq.s32.totalorder %s27, 0
      %p99 = por %p97, %p98
      %p100 = scmp.ne.s32.totalorder %s89, %s92
      %p101 = scmp.eq.s32.totalorder %s32, 1
      %p102 = por %p100, %p101
      %p103 = scmp.ne.s32.totalorder %s92, %s93
      %p104 = scmp.eq.s32.totalorder %s32, 0
      %p105 = por %p103, %p104
      %p106 = scmp.ne.s32.totalorder %s92, %s93
      %p107 = scmp.eq.s32.totalorder %s33, 1
      %p108 = por %p106, %p107
      %p110 = scmp.ne.s32.totalorder %s93, %s109
      %p111 = scmp.eq.s32.totalorder %s33, 0
      %p112 = por %p110, %p111
      %s114 = sadd.s32 %s113, 1
      %p117 = scmp.eq.s32.totalorder %s27, 1
      %p118 = scmp.ne.s32.totalorder %s113, %s115
      %p119 = scmp.eq.s32.totalorder %s27, 0
      %p120 = por %p118, %p119
      %p121 = scmp.ne.s32.totalorder %s113, %s115
      %p122 = scmp.eq.s32.totalorder %s32, 1
      %p123 = por %p121, %p122
      %p124 = scmp.ne.s32.totalorder %s115, %s116
      %p125 = scmp.eq.s32.totalorder %s32, 0
      %p126 = por %p124, %p125
      %p127 = scmp.ne.s32.totalorder %s115, %s116
      %p128 = scmp.eq.s32.totalorder %s33, 1
      %p129 = por %p127, %p128
      %p131 = scmp.ne.s32.totalorder %s116, %s130
      %p132 = scmp.eq.s32.totalorder %s33, 0
      %p133 = por %p131, %p132
      %s135 = sadd.s32 %s134, 1
      %p138 = scmp.eq.s32.totalorder %s27, 1
      %p139 = scmp.ne.s32.totalorder %s134, %s136
      %p140 = scmp.eq.s32.totalorder %s27, 0
      %p141 = por %p139, %p140
      %p142 = scmp.ne.s32.totalorder %s134, %s136
      %p143 = scmp.eq.s32.totalorder %s32, 1
      %p144 = por %p142, %p143
      %p145 = scmp.ne.s32.totalorder %s136, %s137
      %p146 = scmp.eq.s32.totalorder %s32, 0
      %p147 = por %p145, %p146
      %p148 = scmp.ne.s32.totalorder %s136, %s137
      %p149 = scmp.eq.s32.totalorder %s33, 1
      %p150 = por %p148, %p149
      %p152 = scmp.ne.s32.totalorder %s137, %s151
      %p153 = scmp.eq.s32.totalorder %s33, 0
      %p154 = por %p152, %p153
      %s156 = sadd.s32 %s155, 1
      %p159 = scmp.eq.s32.totalorder %s27, 1
      %p160 = scmp.ne.s32.totalorder %s155, %s157
      %p161 = scmp.eq.s32.totalorder %s27, 0
      %p162 = por %p160, %p161
      %p163 = scmp.ne.s32.totalorder %s155, %s157
      %p164 = scmp.eq.s32.totalorder %s32, 1
      %p165 = por %p163, %p164
      %p166 = scmp.ne.s32.totalorder %s157, %s158
      %p167 = scmp.eq.s32.totalorder %s32, 0
      %p168 = por %p166, %p167
      %p169 = scmp.ne.s32.totalorder %s157, %s158
      %p170 = scmp.eq.s32.totalorder %s33, 1
      %p171 = por %p169, %p170
      %p173 = scmp.ne.s32.totalorder %s158, %s172
      %p174 = scmp.eq.s32.totalorder %s33, 0
      %p175 = por %p173, %p174
      %s176 = ssub.s32 %s27, %s34
      %p177 = scmp.eq.s32.totalorder %s176, 0
      %s179 = sadd.s32 %s178, 1
      %s180 = scalar_select %p177, %s178, %s179
      %p183 = pneg %p177
      %p184 = scmp.eq.s32.totalorder %s27, 1
      %p185 = por %p183, %p184
      %p186 = scmp.ne.s32.totalorder %s178, %s181
      %p187 = scmp.eq.s32.totalorder %s27, 0
      %p188 = por %p186, %p187
      %p189 = scmp.ne.s32.totalorder %s178, %s181
      %p190 = scmp.eq.s32.totalorder %s32, 1
      %p191 = por %p189, %p190
      %p192 = scmp.ne.s32.totalorder %s181, %s182
      %p193 = scmp.eq.s32.totalorder %s32, 0
      %p194 = por %p192, %p193
      %p195 = scmp.ne.s32.totalorder %s181, %s182
      %p196 = scmp.eq.s32.totalorder %s33, 1
      %p197 = por %p195, %p196
      %p199 = scmp.ne.s32.totalorder %s182, %s198
      %p200 = scmp.eq.s32.totalorder %s33, 0
      %p201 = por %p199, %p200
      %s202 = ssub.s32 %s27, %s34
      %p203 = scmp.eq.s32.totalorder %s202, 0
      %s205 = sadd.s32 %s204, 1
      %s206 = scalar_select %p203, %s204, %s205
      %p209 = pneg %p203
      %p210 = scmp.eq.s32.totalorder %s27, 1
      %p211 = por %p209, %p210
      %p212 = scmp.ne.s32.totalorder %s204, %s207
      %p213 = scmp.eq.s32.totalorder %s27, 0
      %p214 = por %p212, %p213
      %p215 = scmp.ne.s32.totalorder %s204, %s207
      %p216 = scmp.eq.s32.totalorder %s32, 1
      %p217 = por %p215, %p216
      %p218 = scmp.ne.s32.totalorder %s207, %s208
      %p219 = scmp.eq.s32.totalorder %s32, 0
      %p220 = por %p218, %p219
      %p221 = scmp.ne.s32.totalorder %s207, %s208
      %p222 = scmp.eq.s32.totalorder %s33, 1
      %p223 = por %p221, %p222
      %p225 = scmp.ne.s32.totalorder %s208, %s224
      %p226 = scmp.eq.s32.totalorder %s33, 0
      %p227 = por %p225, %p226
      %p228 = scmp.le.s32.totalorder 1, %s27
      %p229 = scmp.lt.s32.totalorder %s27, 3
      %p230 = pnand %p228, %p229
      %p231 = pneg %p230
      // Predicated region
      $region9: #{tpu_custom_call.1} parent=5 // pred_check
        _
      $region10: #{tpu_custom_call.1} parent=5 // pred_check_branch
        %233 = sbr.rel (%p230) target = $region12
      $region11: #{tpu_custom_call.1} parent=5 // pred_region
        %s234 = ssub.s32 %s27, 1
        // Predicated region
        $region13: #{tpu_custom_call.1} parent=11 // pred_check
          %p235 = pneg %p126
        $region14: #{tpu_custom_call.1} parent=11 // pred_check_branch
          %237 = sbr.rel (%p235) target = $region16
        $region15: #{tpu_custom_call.1} parent=11 // pred_region
          %s239 = ssub.s32 256, 256
          %240 = vsyncadd [#allocation6], %s239
          %s241 = sshll.u32 [#allocation7], 4
          %s242 = int_to_ptr.vmem [resolvable:$true] %s241
          %247 = dma.hbm_to_vmem [thread:$0]  %s3, 256, %s242, [#allocation6], 64, 64, 4
        $region16: #{tpu_custom_call.1} parent=11 // pred_fallthru
          _
        // Predicated region
        $region17: #{tpu_custom_call.1} parent=11 // pred_check
          %p248 = pneg %p147
        $region18: #{tpu_custom_call.1} parent=11 // pred_check_branch
          %250 = sbr.rel (%p248) target = $region20
        $region19: #{tpu_custom_call.1} parent=11 // pred_region
          %s252 = ssub.s32 256, 256
          %253 = vsyncadd [#allocation9], %s252
          %s254 = sshll.u32 [#allocation8], 4
          %s255 = int_to_ptr.vmem [resolvable:$true] %s254
          %260 = dma.hbm_to_vmem [thread:$0]  %s4, 256, %s255, [#allocation9], 64, 64, 4
        $region20: #{tpu_custom_call.1} parent=11 // pred_fallthru
          _
        // Predicated region
        $region21: #{tpu_custom_call.1} parent=11 // pred_check
          %p261 = pneg %p168
        $region22: #{tpu_custom_call.1} parent=11 // pred_check_branch
          %263 = sbr.rel (%p261) target = $region24
        $region23: #{tpu_custom_call.1} parent=11 // pred_region
          _
        $region24: #{tpu_custom_call.1} parent=11 // pred_fallthru
          _
      $region12: #{tpu_custom_call.1} parent=5 // pred_fallthru
        _
      %p264 = scmp.lt.s32.totalorder %s27, 2
      // Predicated region
      $region25: #{tpu_custom_call.1} parent=5 // pred_check
        %p265 = pneg %p264
      $region26: #{tpu_custom_call.1} parent=5 // pred_check_branch
        %267 = sbr.rel (%p265) target = $region28
      $region27: #{tpu_custom_call.1} parent=5 // pred_region
        // Predicated region
        $region29: #{tpu_custom_call.1} parent=27 // pred_check
          %p268 = pneg %p47
        $region30: #{tpu_custom_call.1} parent=27 // pred_check_branch
          %270 = sbr.rel (%p268) target = $region32
        $region31: #{tpu_custom_call.1} parent=27 // pred_region
          %s271 = sand.u32 %s37, 1
          %s272 = scalar_lea.sflag [#allocation3], %s271
          %s273 = sand.u32 %s37, 1
          %s274 = smul.addr %s273, 4
          %s275 = scalar_lea.vmem [#allocation2], %s274
          %s277 = ssub.s32 64, 64
          %278 = vsyncadd %s272, %s277
          %s279 = smul.addr %s27, 64
          %s280 = scalar_lea.hbm %s0, %s279
          %s282 = sshll.u32 %s275, 4
          %s283 = int_to_ptr.vmem [resolvable:$true] %s282
          %285 = dma.hbm_to_vmem [thread:$0]  %s280, 64, %s283, %s272
        $region32: #{tpu_custom_call.1} parent=27 // pred_fallthru
          _
        // Predicated region
        $region33: #{tpu_custom_call.1} parent=27 // pred_check
          %p286 = pneg %p73
        $region34: #{tpu_custom_call.1} parent=27 // pred_check_branch
          %288 = sbr.rel (%p286) target = $region36
        $region35: #{tpu_custom_call.1} parent=27 // pred_region
          %s289 = sand.u32 %s27, 1
          %s290 = scalar_lea.sflag [#allocation6], %s289
          %s291 = sand.u32 %s63, 1
          %s292 = smul.addr %s291, 8
          %s293 = scalar_lea.vmem [#allocation5], %s292
          %s295 = ssub.s32 128, 128
          %296 = vsyncadd %s290, %s295
          %s297 = smul.addr %s27, 2
          %s298 = smul.addr %s297, 64
          %s299 = scalar_lea.hbm %s1, %s298
          %s300 = sshll.u32 %s293, 4
          %s301 = int_to_ptr.vmem [resolvable:$true] %s300
          %306 = dma.hbm_to_vmem [thread:$0]  %s299, 128, %s301, %s290, 64, 64, 4
        $region36: #{tpu_custom_call.1} parent=27 // pred_fallthru
          _
        // Predicated region
        $region37: #{tpu_custom_call.1} parent=27 // pred_check
          %p307 = pneg %p99
        $region38: #{tpu_custom_call.1} parent=27 // pred_check_branch
          %309 = sbr.rel (%p307) target = $region40
        $region39: #{tpu_custom_call.1} parent=27 // pred_region
          %p310 = scmp.lt.s32.totalorder %s27, 1
          %s311 = scalar_select %p310, %s27, 1
          %s312 = scalar_lea.vmem %s2, %s311
        $region40: #{tpu_custom_call.1} parent=27 // pred_fallthru
          _
      $region28: #{tpu_custom_call.1} parent=5 // pred_fallthru
        _
      %p313 = scmp.le.s32.totalorder 1, %s27
      %p314 = scmp.lt.s32.totalorder %s27, 3
      %p315 = pnand %p313, %p314
      %p316 = pneg %p315
      // Predicated region
      $region41: #{tpu_custom_call.1} parent=5 // pred_check
        _
      $region42: #{tpu_custom_call.1} parent=5 // pred_check_branch
        %318 = sbr.rel (%p315) target = $region44
      $region43: #{tpu_custom_call.1} parent=5 // pred_region
        %s319 = ssub.s32 %s27, 1
        %s320 = sand.u32 %s40, 1
        %s321 = scalar_lea.sflag [#allocation3], %s320
        %s322 = sand.u32 %s40, 1
        %s323 = smul.addr %s322, 4
        %s324 = scalar_lea.vmem [#allocation2], %s323
        // Predicated region
        $region45: #{tpu_custom_call.1} parent=43 // pred_check
          %p325 = pneg %p53
        $region46: #{tpu_custom_call.1} parent=43 // pred_check_branch
          %327 = sbr.rel (%p325) target = $region48
        $region47: #{tpu_custom_call.1} parent=43 // pred_region
          %328 = dma.done %s321, 64
        $region48: #{tpu_custom_call.1} parent=43 // pred_fallthru
          _
        %s329 = sand.u32 %s32, 1
        %s330 = scalar_lea.sflag [#allocation6], %s329
        %s331 = sand.u32 %s66, 1
        %s332 = smul.addr %s331, 8
        %s333 = scalar_lea.vmem [#allocation5], %s332
        // Predicated region
        $region49: #{tpu_custom_call.1} parent=43 // pred_check
          %p334 = pneg %p79
        $region50: #{tpu_custom_call.1} parent=43 // pred_check_branch
          %336 = sbr.rel (%p334) target = $region52
        $region51: #{tpu_custom_call.1} parent=43 // pred_region
          %337 = dma.done %s330, 128
        $region52: #{tpu_custom_call.1} parent=43 // pred_fallthru
          _
        // Predicated region
        $region53: #{tpu_custom_call.1} parent=43 // pred_check
          %p338 = pneg %p126
        $region54: #{tpu_custom_call.1} parent=43 // pred_check_branch
          %340 = sbr.rel (%p338) target = $region56
        $region55: #{tpu_custom_call.1} parent=43 // pred_region
          %341 = dma.done [#allocation6], 256
        $region56: #{tpu_custom_call.1} parent=43 // pred_fallthru
          _
        // Predicated region
        $region57: #{tpu_custom_call.1} parent=43 // pred_check
          %p342 = pneg %p147
        $region58: #{tpu_custom_call.1} parent=43 // pred_check_branch
          %344 = sbr.rel (%p342) target = $region60
        $region59: #{tpu_custom_call.1} parent=43 // pred_region
          %345 = dma.done [#allocation9], 256
        $region60: #{tpu_custom_call.1} parent=43 // pred_fallthru
          _
        %s346 = sand.u32 %s40, 1
        %s347 = scalar_lea.sflag [#allocation3], %s346
        %s348 = sand.u32 %s40, 1
        %s349 = smul.addr %s348, 4
        %s350 = scalar_lea.vmem [#allocation2], %s349
        %p351 = pneg %p53
        %p352 = pneg %p50
        %s353 = sand.u32 %s32, 1
        %s354 = scalar_lea.sflag [#allocation6], %s353
        %s355 = sand.u32 %s66, 1
        %s356 = smul.addr %s355, 8
        %s357 = scalar_lea.vmem [#allocation5], %s356
        %p358 = pneg %p79
        %p359 = pneg %p76
        %p360 = scmp.lt.s32.totalorder %s32, 1
        %s361 = scalar_select %p360, %s32, 1
        %s362 = scalar_lea.vmem %s2, %s361
        %p363 = pneg %p105
        %p364 = pneg %p102
        %p365 = pneg %p126
        %p366 = pneg %p123
        %p367 = pneg %p147
        %p368 = pneg %p144
        %p369 = pneg %p168
        %p370 = pneg %p165
        %p371 = pneg %p194
        %p372 = pneg %p191
        %s373 = sand.u32 %s181, 1
        %s374 = scalar_lea.sflag [#allocation4], %s373
        %s375 = sand.u32 %s181, 1
        %s376 = smul.addr %s375, 8
        %s377 = scalar_lea.vmem [#allocation10], %s376
        %p378 = pneg %p220
        %p379 = pneg %p217
        %s380 = sand.u32 %s207, 1
        %s381 = scalar_lea.sflag [#allocation12], %s380
        %s382 = sand.u32 %s207, 1
        %s383 = smul.addr %s382, 8
        %s384 = scalar_lea.vmem [#allocation11], %s383
        %p385 = scmp.lt.s32.totalorder %s32, 1
        %s386 = scalar_select %p385, %s32, 1
        %s387 = scalar_lea.vmem %s2, %s386
        %v389 = vld [vmem:[%s324] sm:$0xf]
        %v390 = vld [vmem:[%s333] sm:$0xf]
        %v391 = vld [vmem:[%s333 + $0x4] sm:$0xf]
        %v392 = vld [vmem:[#allocation7] sm:$0xf]
        %v393 = vld [vmem:[#allocation7 + $0x4] sm:$0xf]
        %v394 = vld [vmem:[#allocation7 + $0x8] sm:$0xf]
        %v395 = vld [vmem:[#allocation7 + $0xc] sm:$0xf]
        %v400 = vunpack.c.l.b16 %v392
        %v401 = vunpack.c.l.b16 %v393
        %v402 = vunpack.c.l.b16 %v394
        %v403 = vunpack.c.l.b16 %v395
        %v404 = vpack.c.b16 %v401, %v400
        %v405 = vpack.c.b16 %v403, %v402
        %vm408 = vcmask 261120
        %v410 = vsel %vm408, %v389, 0
        %412 = vmatprep.subr.bf16.mxu0 0
        %413 = vmatpush1.bf16.msra.mxu0 %v404
        %414 = vmatprep.subr.bf16.mxu0 0
        %415 = vmatpush1.bf16.msra.mxu0 %v405
        %416 = vmatprep.subr.bf16.mxu0 0
        %417 = vmatpush1.bf16.msra.mxu0 0
        %418 = vmatprep.subr.bf16.mxu0 0
        %419 = vmatpush1.bf16.msra.mxu0 0
        %420 = vmatprep.subr.bf16.mxu0 0
        %421 = vmatpush1.bf16.msra.mxu0 0
        %422 = vmatprep.subr.bf16.mxu0 0
        %423 = vmatpush1.bf16.msra.mxu0 0
        %424 = vmatprep.subr.bf16.mxu0 0
        %425 = vmatpush1.bf16.msra.mxu0 0
        %426 = vmatprep.subr.bf16.mxu0 0
        %427 = vmatpush1.bf16.msra.mxu0 0
        %428 = vmatprep.subr.bf16.mxu0 0
        %429 = vmatpush1.bf16.msra.mxu0 0
        %430 = vmatprep.subr.bf16.mxu0 0
        %431 = vmatpush1.bf16.msra.mxu0 0
        %432 = vmatprep.subr.bf16.mxu0 0
        %433 = vmatpush1.bf16.msra.mxu0 0
        %434 = vmatprep.subr.bf16.mxu0 0
        %435 = vmatpush1.bf16.msra.mxu0 0
        %436 = vmatprep.subr.bf16.mxu0 0
        %437 = vmatpush1.bf16.msra.mxu0 0
        %438 = vmatprep.subr.bf16.mxu0 0
        %439 = vmatpush1.bf16.msra.mxu0 0
        %440 = vmatprep.subr.bf16.mxu0 0
        %441 = vmatpush1.bf16.msra.mxu0 0
        %442 = vmatprep.subr.bf16.mxu0 0
        %443 = vmatpush1.bf16.msra.mxu0 0
        %444 = vmatprep.mubr.bf16.mxu0 0
        %445 = vmatmul.mubr.bf16.gmra.mrb[0].mxu0 %v410
        %v446 = vpop.f32.mrb[0].mxu0
        %v447 = vadd.f32 0.0, %v446
        %v448 = vpop.f32.mrb[0].mxu0
        %v449 = vpop.f32.mrb[0].mxu0
        %v450 = vpop.f32.mrb[0].mxu0
        %451 = vdwg.mxu0
        %v452 = vpack.c.bf16 %v447, %v447
        %v453 = vld [vmem:[%s387] sm:$0x1]
        %v455 = vlaneseq
        %v456 = vshrl.u32 %v455, 7
        %v457 = vsub.s32 0, %v456
        %v458 = vrot.slane %v453, %v457
        %v462 = vunpack.c.l.b16 %v390
        %v463 = vunpack.c.l.b16 %v391
        %v464 = vpack.c.b16 %v463, %v462
        %v466 = vsel %vm408, %v452, 0
        %v469 = vsel %vm408, %v464, 0
        %471 = vmatprep.subr.bf16.mxu0 0
        %472 = vmatpush1.bf16.xpose.msra.mxu0 %v469
        %473 = vmatprep.subr.bf16.mxu0 0
        %474 = vmatpush1.bf16.xpose.msra.mxu0 0
        %475 = vmatprep.subr.bf16.mxu0 0
        %476 = vmatpush1.bf16.xpose.msra.mxu0 0
        %477 = vmatprep.subr.bf16.mxu0 0
        %478 = vmatpush1.bf16.xpose.msra.mxu0 0
        %479 = vmatprep.subr.bf16.mxu0 0
        %480 = vmatpush1.bf16.xpose.msra.mxu0 0
        %481 = vmatprep.subr.bf16.mxu0 0
        %482 = vmatpush1.bf16.xpose.msra.mxu0 0
        %483 = vmatprep.subr.bf16.mxu0 0
        %484 = vmatpush1.bf16.xpose.msra.mxu0 0
        %485 = vmatprep.subr.bf16.mxu0 0
        %486 = vmatpush1.bf16.xpose.msra.mxu0 0
        %487 = vmatprep.subr.bf16.mxu0 0
        %488 = vmatpush1.bf16.xpose.msra.mxu0 0
        %489 = vmatprep.subr.bf16.mxu0 0
        %490 = vmatpush1.bf16.xpose.msra.mxu0 0
        %491 = vmatprep.subr.bf16.mxu0 0
        %492 = vmatpush1.bf16.xpose.msra.mxu0 0
        %493 = vmatprep.subr.bf16.mxu0 0
        %494 = vmatpush1.bf16.xpose.msra.mxu0 0
        %495 = vmatprep.subr.bf16.mxu0 0
        %496 = vmatpush1.bf16.xpose.msra.mxu0 0
        %497 = vmatprep.subr.bf16.mxu0 0
        %498 = vmatpush1.bf16.xpose.msra.mxu0 0
        %499 = vmatprep.subr.bf16.mxu0 0
        %500 = vmatpush1.bf16.xpose.msra.mxu0 0
        %501 = vmatprep.subr.bf16.mxu0 0
        %502 = vmatpush1.bf16.xpose.msra.mxu0 0
        %503 = vmatprep.mubr.bf16.mxu0 0
        %504 = vmatmul.mubr.bf16.gmra.mrb[0].mxu0 %v466
        %v505 = vpop.f32.mrb[0].mxu0
        %v506 = vadd.f32 %v458, %v505
        %v507 = vpop.f32.mrb[0].mxu0
        %v508 = vpop.f32.mrb[0].mxu0
        %v509 = vpop.f32.mrb[0].mxu0
        %510 = vdwg.mxu0
        %vm511 = vcmask 130048
        %v512 = vsel %vm511, %v506, -inf
        %513 = vmax.xlane.f32.xlu0 %v512
        %v514 = vpop.xlane.xlu0 %513
        %v515 = vsub.f32 %v506, %v514
        %v516 = vmul.f32 %v515, 1.442695
        %v517 = vpow.pop %v516
        %v518 = vsel %vm511, %v517, 0.0
        %519 = vadd.xlane.f32.xlu0 %v518
        %v520 = vpop.xlane.xlu0 %519
        %v521 = vrcp.pop %v520
        %v522 = vmul.f32 %v517, %v521
        %523 = vst.msk [vmem:[%s384] sm:$0xff] %vm511, %v522
        %v524 = vpack.c.bf16 %v522, %v522
        %v527 = vsel %vm511, %v524, 0
        %529 = vmatprep.subr.bf16.mxu0 0
        %530 = vmatpush1.bf16.msra.mxu0 %v464
        %531 = vmatprep.subr.bf16.mxu0 0
        %532 = vmatpush1.bf16.msra.mxu0 0
        %533 = vmatprep.subr.bf16.mxu0 0
        %534 = vmatpush1.bf16.msra.mxu0 0
        %535 = vmatprep.subr.bf16.mxu0 0
        %536 = vmatpush1.bf16.msra.mxu0 0
        %537 = vmatprep.subr.bf16.mxu0 0
        %538 = vmatpush1.bf16.msra.mxu0 0
        %539 = vmatprep.subr.bf16.mxu0 0
        %540 = vmatpush1.bf16.msra.mxu0 0
        %541 = vmatprep.subr.bf16.mxu0 0
        %542 = vmatpush1.bf16.msra.mxu0 0
        %543 = vmatprep.subr.bf16.mxu0 0
        %544 = vmatpush1.bf16.msra.mxu0 0
        %545 = vmatprep.subr.bf16.mxu0 0
        %546 = vmatpush1.bf16.msra.mxu0 0
        %547 = vmatprep.subr.bf16.mxu0 0
        %548 = vmatpush1.bf16.msra.mxu0 0
        %549 = vmatprep.subr.bf16.mxu0 0
        %550 = vmatpush1.bf16.msra.mxu0 0
        %551 = vmatprep.subr.bf16.mxu0 0
        %552 = vmatpush1.bf16.msra.mxu0 0
        %553 = vmatprep.subr.bf16.mxu0 0
        %554 = vmatpush1.bf16.msra.mxu0 0
        %555 = vmatprep.subr.bf16.mxu0 0
        %556 = vmatpush1.bf16.msra.mxu0 0
        %557 = vmatprep.subr.bf16.mxu0 0
        %558 = vmatpush1.bf16.msra.mxu0 0
        %559 = vmatprep.subr.bf16.mxu0 0
        %560 = vmatpush1.bf16.msra.mxu0 0
        %561 = vmatprep.mubr.bf16.mxu0 0
        %562 = vmatmul.mubr.bf16.gmra.mrb[0].mxu0 %v527
        %v563 = vpop.f32.mrb[0].mxu0
        %v564 = vadd.f32 0.0, %v563
        %v565 = vpop.f32.mrb[0].mxu0
        %v566 = vpop.f32.mrb[0].mxu0
        %v567 = vpop.f32.mrb[0].mxu0
        %568 = vdwg.mxu0
        %v569 = vpack.c.bf16 %v564, %v564
        %v570 = vld [vmem:[#allocation8] sm:$0xf]
        %v571 = vld [vmem:[#allocation8 + $0x4] sm:$0xf]
        %v572 = vld [vmem:[#allocation8 + $0x8] sm:$0xf]
        %v573 = vld [vmem:[#allocation8 + $0xc] sm:$0xf]
        %v574 = vld [vmem:[%s5] sm:$0xf]
        %v575 = vld [vmem:[%s5 + $0x4] sm:$0xf]
        %v576 = vld [vmem:[%s5 + $0x8] sm:$0xf]
        %v577 = vld [vmem:[%s5 + $0xc] sm:$0xf]
        %v582 = vunpack.c.l.b16 %v574
        %v583 = vunpack.c.l.b16 %v575
        %v584 = vunpack.c.l.b16 %v576
        %v585 = vunpack.c.l.b16 %v577
        %v586 = vpack.c.b16 %v583, %v582
        %v587 = vpack.c.b16 %v585, %v584
        %590 = vmatprep.subr.bf16.mxu0 0
        %591 = vmatpush1.bf16.msra.mxu0 %v586
        %592 = vmatprep.subr.bf16.mxu0 0
        %593 = vmatpush1.bf16.msra.mxu0 %v587
        %594 = vmatprep.subr.bf16.mxu0 0
        %595 = vmatpush1.bf16.msra.mxu0 0
        %596 = vmatprep.subr.bf16.mxu0 0
        %597 = vmatpush1.bf16.msra.mxu0 0
        %598 = vmatprep.subr.bf16.mxu0 0
        %599 = vmatpush1.bf16.msra.mxu0 0
        %600 = vmatprep.subr.bf16.mxu0 0
        %601 = vmatpush1.bf16.msra.mxu0 0
        %602 = vmatprep.subr.bf16.mxu0 0
        %603 = vmatpush1.bf16.msra.mxu0 0
        %604 = vmatprep.subr.bf16.mxu0 0
        %605 = vmatpush1.bf16.msra.mxu0 0
        %606 = vmatprep.subr.bf16.mxu0 0
        %607 = vmatpush1.bf16.msra.mxu0 0
        %608 = vmatprep.subr.bf16.mxu0 0
        %609 = vmatpush1.bf16.msra.mxu0 0
        %610 = vmatprep.subr.bf16.mxu0 0
        %611 = vmatpush1.bf16.msra.mxu0 0
        %612 = vmatprep.subr.bf16.mxu0 0
        %613 = vmatpush1.bf16.msra.mxu0 0
        %614 = vmatprep.subr.bf16.mxu0 0
        %615 = vmatpush1.bf16.msra.mxu0 0
        %616 = vmatprep.subr.bf16.mxu0 0
        %617 = vmatpush1.bf16.msra.mxu0 0
        %618 = vmatprep.subr.bf16.mxu0 0
        %619 = vmatpush1.bf16.msra.mxu0 0
        %620 = vmatprep.subr.bf16.mxu0 0
        %621 = vmatpush1.bf16.msra.mxu0 0
        %622 = vmatprep.mubr.bf16.mxu0 0
        %623 = vmatmul.mubr.bf16.gmra.mrb[0].mxu0 %v410
        %v624 = vpop.f32.mrb[0].mxu0
        %v625 = vadd.f32 0.0, %v624
        %v626 = vpop.f32.mrb[0].mxu0
        %v627 = vpop.f32.mrb[0].mxu0
        %v628 = vpop.f32.mrb[0].mxu0
        %629 = vdwg.mxu0
        %v634 = vunpack.c.l.b16 %v570
        %v635 = vunpack.c.l.b16 %v571
        %v636 = vunpack.c.l.b16 %v572
        %v637 = vunpack.c.l.b16 %v573
        %v638 = vpack.c.b16 %v635, %v634
        %v639 = vpack.c.b16 %v637, %v636
        %v643 = vsel %vm408, %v569, 0
        %645 = vmatprep.subr.bf16.mxu0 0
        %646 = vmatpush1.bf16.msra.mxu0 %v638
        %647 = vmatprep.subr.bf16.mxu0 0
        %648 = vmatpush1.bf16.msra.mxu0 %v639
        %649 = vmatprep.subr.bf16.mxu0 0
        %650 = vmatpush1.bf16.msra.mxu0 0
        %651 = vmatprep.subr.bf16.mxu0 0
        %652 = vmatpush1.bf16.msra.mxu0 0
        %653 = vmatprep.subr.bf16.mxu0 0
        %654 = vmatpush1.bf16.msra.mxu0 0
        %655 = vmatprep.subr.bf16.mxu0 0
        %656 = vmatpush1.bf16.msra.mxu0 0
        %657 = vmatprep.subr.bf16.mxu0 0
        %658 = vmatpush1.bf16.msra.mxu0 0
        %659 = vmatprep.subr.bf16.mxu0 0
        %660 = vmatpush1.bf16.msra.mxu0 0
        %661 = vmatprep.subr.bf16.mxu0 0
        %662 = vmatpush1.bf16.msra.mxu0 0
        %663 = vmatprep.subr.bf16.mxu0 0
        %664 = vmatpush1.bf16.msra.mxu0 0
        %665 = vmatprep.subr.bf16.mxu0 0
        %666 = vmatpush1.bf16.msra.mxu0 0
        %667 = vmatprep.subr.bf16.mxu0 0
        %668 = vmatpush1.bf16.msra.mxu0 0
        %669 = vmatprep.subr.bf16.mxu0 0
        %670 = vmatpush1.bf16.msra.mxu0 0
        %671 = vmatprep.subr.bf16.mxu0 0
        %672 = vmatpush1.bf16.msra.mxu0 0
        %673 = vmatprep.subr.bf16.mxu0 0
        %674 = vmatpush1.bf16.msra.mxu0 0
        %675 = vmatprep.subr.bf16.mxu0 0
        %676 = vmatpush1.bf16.msra.mxu0 0
        %677 = vmatprep.mubr.bf16.mxu0 0
        %678 = vmatmul.mubr.bf16.gmra.mrb[0].mxu0 %v643
        %v679 = vpop.f32.mrb[0].mxu0
        %v680 = vadd.f32 %v625, %v679
        %v681 = vpop.f32.mrb[0].mxu0
        %v682 = vpop.f32.mrb[0].mxu0
        %v683 = vpop.f32.mrb[0].mxu0
        %684 = vdwg.mxu0
        %v685 = vtanh.pop %v680
        %686 = vst.msk [vmem:[%s377] sm:$0xff] %vm408, %v685
        %s687 = sand.u32 %s181, 1
        %s688 = scalar_lea.sflag [#allocation4], %s687
        %s689 = sand.u32 %s181, 1
        %s690 = smul.addr %s689, 8
        %s691 = scalar_lea.vmem [#allocation10], %s690
        %s692 = sand.u32 %s207, 1
        %s693 = scalar_lea.sflag [#allocation12], %s692
        %s694 = sand.u32 %s207, 1
        %s695 = smul.addr %s694, 8
        %s696 = scalar_lea.vmem [#allocation11], %s695
        // Predicated region
        $region61: #{tpu_custom_call.1} parent=43 // pred_check
          %p697 = pneg %p191
        $region62: #{tpu_custom_call.1} parent=43 // pred_check_branch
          %699 = sbr.rel (%p697) target = $region64
        $region63: #{tpu_custom_call.1} parent=43 // pred_region
          %s701 = ssub.s32 128, 128
          %702 = vsyncadd %s688, %s701
          %s703 = smul.addr %s32, 128
          %s704 = scalar_lea.hbm %s6, %s703
          %s706 = sshll.u32 %s691, 4
          %s707 = int_to_ptr.vmem [resolvable:$true] %s706
          %709 = dma.vmem_to_hbm [thread:$0]  %s707, 128, %s704, %s688
        $region64: #{tpu_custom_call.1} parent=43 // pred_fallthru
          _
        // Predicated region
        $region65: #{tpu_custom_call.1} parent=43 // pred_check
          %p710 = pneg %p217
        $region66: #{tpu_custom_call.1} parent=43 // pred_check_branch
          %712 = sbr.rel (%p710) target = $region68
        $region67: #{tpu_custom_call.1} parent=43 // pred_region
          %s714 = ssub.s32 128, 128
          %715 = vsyncadd %s693, %s714
          %s716 = smul.addr %s32, 128
          %s717 = scalar_lea.hbm %s7, %s716
          %s719 = sshll.u32 %s696, 4
          %s720 = int_to_ptr.vmem [resolvable:$true] %s719
          %722 = dma.vmem_to_hbm [thread:$0]  %s720, 128, %s717, %s693
        $region68: #{tpu_custom_call.1} parent=43 // pred_fallthru
          _
      $region44: #{tpu_custom_call.1} parent=5 // pred_fallthru
        _
      %p723 = scmp.le.s32.totalorder 2, %s27
      // Predicated region
      $region69: #{tpu_custom_call.1} parent=5 // pred_check
        %p724 = pneg %p723
      $region70: #{tpu_custom_call.1} parent=5 // pred_check_branch
        %726 = sbr.rel (%p724) target = $region72
      $region71: #{tpu_custom_call.1} parent=5 // pred_region
        %s727 = ssub.s32 %s27, 2
        // Predicated region
        $region73: #{tpu_custom_call.1} parent=71 // pred_check
          %p728 = pneg %p197
        $region74: #{tpu_custom_call.1} parent=71 // pred_check_branch
          %730 = sbr.rel (%p728) target = $region76
        $region75: #{tpu_custom_call.1} parent=71 // pred_region
          %s731 = sand.u32 %s182, 1
          %s732 = scalar_lea.sflag [#allocation4], %s731
          %s733 = sand.u32 %s182, 1
          %s734 = smul.addr %s733, 8
          %s735 = scalar_lea.vmem [#allocation10], %s734
          %736 = dma.done %s732, 128
        $region76: #{tpu_custom_call.1} parent=71 // pred_fallthru
          _
        // Predicated region
        $region77: #{tpu_custom_call.1} parent=71 // pred_check
          %p737 = pneg %p223
        $region78: #{tpu_custom_call.1} parent=71 // pred_check_branch
          %739 = sbr.rel (%p737) target = $region80
        $region79: #{tpu_custom_call.1} parent=71 // pred_region
          %s740 = sand.u32 %s208, 1
          %s741 = scalar_lea.sflag [#allocation12], %s740
          %s742 = sand.u32 %s208, 1
          %s743 = smul.addr %s742, 8
          %s744 = scalar_lea.vmem [#allocation11], %s743
          %745 = dma.done %s741, 128
        $region80: #{tpu_custom_call.1} parent=71 // pred_fallthru
          _
      $region72: #{tpu_custom_call.1} parent=5 // pred_fallthru
        _
    $region6: #{tpu_custom_call.1} parent=1 // loop_footer
      %s31 = sadd.s32 1, %s27
    $region7: #{tpu_custom_call.1} parent=1 // loop_footer_branch
      %26 = sbr.rel target = $region3
    $region8: #{tpu_custom_call.1} parent=1 // loop_exit
      _
    %746 = vsyncpa [#allocation3], 1
    %s747 = scalar_lea.sflag [#allocation3], 1
    %748 = vsyncpa %s747, 1
    %749 = vsyncpa [#allocation6], 1
    %s750 = scalar_lea.sflag [#allocation6], 1
    %751 = vsyncpa %s750, 1
    %752 = vsyncpa [#allocation9], 1
    %753 = vsyncpa [#allocation4], 1
    %s754 = scalar_lea.sflag [#allocation4], 1
    %755 = vsyncpa %s754, 1
    %756 = vsyncpa [#allocation12], 1
    %s757 = scalar_lea.sflag [#allocation12], 1
    %758 = vsyncpa %s757, 1

// kernel: tpu_custom_call.1
$region0: #{tpu_custom_call.1}
  #allocation0 [shape = 'u32[]', space=smem, size = 0x4, offset = 0x4, fixed_abs, tag = 'smem constant byte address 0x4 - core index']
  #allocation1 [shape = 'u32[144,128]{1,0:T(1,128)}', space=vmem, size = 0x12000, scoped, tag = 'internal scratch']
  %s0 = inlined_call_operand.hbm [shape: bf16[2,8,32], index: 0, kind: input, shape index: {}]
  %s1 = inlined_call_operand.hbm [shape: bf16[2,16,32], index: 1, kind: input, shape index: {}]
  %s2 = inlined_call_operand.vmem [shape: f32[2,1,16], index: 2, kind: input, shape index: {}]
  %s3 = inlined_call_operand.hbm [shape: bf16[32,32], index: 3, kind: input, shape index: {}]
  %s4 = inlined_call_operand.hbm [shape: bf16[32,32], index: 4, kind: input, shape index: {}]
  %s5 = inlined_call_operand.vmem [shape: bf16[32,32], index: 5, kind: input, shape index: {}]
  %s6 = inlined_call_operand.hbm [shape: f32[2,8,32], index: 6, kind: output, shape index: {0}]
  %s7 = inlined_call_operand.hbm [shape: f32[2,8,16], index: 7, kind: output, shape index: {1}]
  %8 = xla_tuple %s6, %s7
  %s9 = sld [smem:[#allocation0]]
  $region81: #{tpu_custom_call.1} parent=0
    _
  %s11 = ssub.s32 1, %s9
  %s12 = scalar_select 0, %s11, %s9
  $region1: #{tpu_custom_call.1} parent=0
    #allocation2 [shape = 'u8[4096]{0}', space=vmem, size = 0x1000, scoped, tag = 'input window, operand 0']
    #allocation3 [shape = 's32[2]{0}', space=sflag, size = 0x8, scoped, tag = 'scoped memory for tpu_custom_call.1']
    #allocation4 [shape = 's32[2]{0}', space=sflag, size = 0x8, scoped, tag = 'scoped memory for tpu_custom_call.1']
    #allocation5 [shape = 'u8[8192]{0}', space=vmem, size = 0x2000, scoped, tag = 'input window, operand 1']
    #allocation6 [shape = 's32[2]{0}', space=sflag, size = 0x8, scoped, tag = 'scoped memory for tpu_custom_call.1']
    #allocation7 [shape = 'u8[8192]{0}', space=vmem, size = 0x2000, scoped, tag = 'input window, operand 3, single buffered']
    #allocation8 [shape = 'u8[8192]{0}', space=vmem, size = 0x2000, scoped, tag = 'input window, operand 4, single buffered']
    #allocation9 [shape = 's32[1]{0}', space=sflag, size = 0x4, scoped, tag = 'scoped memory for tpu_custom_call.1']
    #allocation10 [shape = 'u8[8192]{0}', space=vmem, size = 0x2000, scoped, tag = 'output window, operand 0']
    #allocation11 [shape = 'u8[8192]{0}', space=vmem, size = 0x2000, scoped, tag = 'output window, operand 1']
    #allocation12 [shape = 's32[2]{0}', space=sflag, size = 0x8, scoped, tag = 'scoped memory for tpu_custom_call.1']
    %13 = vsyncpa [#allocation3], 0
    %s14 = scalar_lea.sflag [#allocation3], 1
    %15 = vsyncpa %s14, 0
    %16 = vsyncpa [#allocation6], 0
    %s17 = scalar_lea.sflag [#allocation6], 1
    %18 = vsyncpa %s17, 0
    %19 = vsyncpa [#allocation9], 0
    %20 = vsyncpa [#allocation4], 0
    %s21 = scalar_lea.sflag [#allocation4], 1
    %22 = vsyncpa %s21, 0
    %23 = vsyncpa [#allocation12], 0
    %s24 = scalar_lea.sflag [#allocation12], 1
    %25 = vsyncpa %s24, 0
    loop: start=0, step=1, limit=4
    $region2: #{tpu_custom_call.1} parent=1 // loop_pre_header
      _
    $region3: #{tpu_custom_call.1} parent=1 // loop_header
      %s27 = sphi 0, %s31
      %p28 = scmp.ge.s32.totalorder %s27, 4
      %s37 = sphi 0, %s39
      %s40 = sphi 0, %s37
      %s41 = sphi 0, %s40
      %s57 = sphi 0, %s41
      %s63 = sphi 0, %s65
      %s66 = sphi 0, %s63
      %s67 = sphi 0, %s66
      %s83 = sphi 0, %s67
      %s89 = sphi 0, %s91
      %s92 = sphi 0, %s89
      %s93 = sphi 0, %s92
      %s109 = sphi 0, %s93
      %s113 = sphi 0, %s113
      %s115 = sphi 0, %s113
      %s116 = sphi 0, %s115
      %s130 = sphi 0, %s116
      %s134 = sphi 0, %s134
      %s136 = sphi 0, %s134
      %s137 = sphi 0, %s136
      %s151 = sphi 0, %s137
      %s155 = sphi 0, %s155
      %s157 = sphi 0, %s155
      %s158 = sphi 0, %s157
      %s172 = sphi 0, %s158
      %s178 = sphi 0, %s180
      %s181 = sphi 0, %s178
      %s182 = sphi 0, %s181
      %s198 = sphi 0, %s182
      %s204 = sphi 0, %s206
      %s207 = sphi 0, %s204
      %s208 = sphi 0, %s207
      %s224 = sphi 0, %s208
    $region4: #{tpu_custom_call.1} parent=1 // loop_header_branch
      %30 = sbr.rel (%p28) target = $region8
    $region5: #{tpu_custom_call.1} parent=1 // loop_body
      %s32 = ssub.s32 %s27, 1
      %s33 = ssub.s32 %s27, 2
      %s34 = sadd.s32 %s27, 1
      %s35 = ssub.s32 %s27, %s34
      %p36 = scmp.eq.s32.totalorder %s35, 0
      %s38 = sadd.s32 %s37, 1
      %s39 = scalar_select %p36, %s37, %s38
      %p42 = pneg %p36
      %p43 = scmp.eq.s32.totalorder %s27, 1
      %p44 = por %p42, %p43
      %p45 = scmp.ne.s32.totalorder %s37, %s40
      %p46 = scmp.eq.s32.totalorder %s27, 0
      %p47 = por %p45, %p46
      %p48 = scmp.ne.s32.totalorder %s37, %s40
      %p49 = scmp.eq.s32.totalorder %s32, 1
      %p50 = por %p48, %p49
      %p51 = scmp.ne.s32.totalorder %s40, %s41
      %p52 = scmp.eq.s32.totalorder %s32, 0
      %p53 = por %p51, %p52
      %p54 = scmp.ne.s32.totalorder %s40, %s41
      %p55 = scmp.eq.s32.totalorder %s33, 1
      %p56 = por %p54, %p55
      %p58 = scmp.ne.s32.totalorder %s41, %s57
      %p59 = scmp.eq.s32.totalorder %s33, 0
      %p60 = por %p58, %p59
      %s61 = ssub.s32 %s27, %s34
      %p62 = scmp.eq.s32.totalorder %s61, 0
      %s64 = sadd.s32 %s63, 1
      %s65 = scalar_select %p62, %s63, %s64
      %p68 = pneg %p62
      %p69 = scmp.eq.s32.totalorder %s27, 1
      %p70 = por %p68, %p69
      %p71 = scmp.ne.s32.totalorder %s63, %s66
      %p72 = scmp.eq.s32.totalorder %s27, 0
      %p73 = por %p71, %p72
      %p74 = scmp.ne.s32.totalorder %s63, %s66
      %p75 = scmp.eq.s32.totalorder %s32, 1
      %p76 = por %p74, %p75
      %p77 = scmp.ne.s32.totalorder %s66, %s67
      %p78 = scmp.eq.s32.totalorder %s32, 0
      %p79 = por %p77, %p78
      %p80 = scmp.ne.s32.totalorder %s66, %s67
      %p81 = scmp.eq.s32.totalorder %s33, 1
      %p82 = por %p80, %p81
      %p84 = scmp.ne.s32.totalorder %s67, %s83
      %p85 = scmp.eq.s32.totalorder %s33, 0
      %p86 = por %p84, %p85
      %s87 = ssub.s32 %s27, %s34
      %p88 = scmp.eq.s32.totalorder %s87, 0
      %s90 = sadd.s32 %s89, 1
      %s91 = scalar_select %p88, %s89, %s90
      %p94 = pneg %p88
      %p95 = scmp.eq.s32.totalorder %s27, 1
      %p96 = por %p94, %p95
      %p97 = scmp.ne.s32.totalorder %s89, %s92
      %p98 = scmp.eq.s32.totalorder %s27, 0
      %p99 = por %p97, %p98
      %p100 = scmp.ne.s32.totalorder %s89, %s92
      %p101 = scmp.eq.s32.totalorder %s32, 1
      %p102 = por %p100, %p101
      %p103 = scmp.ne.s32.totalorder %s92, %s93
      %p104 = scmp.eq.s32.totalorder %s32, 0
      %p105 = por %p103, %p104
      %p106 = scmp.ne.s32.totalorder %s92, %s93
      %p107 = scmp.eq.s32.totalorder %s33, 1
      %p108 = por %p106, %p107
      %p110 = scmp.ne.s32.totalorder %s93, %s109
      %p111 = scmp.eq.s32.totalorder %s33, 0
      %p112 = por %p110, %p111
      %s114 = sadd.s32 %s113, 1
      %p117 = scmp.eq.s32.totalorder %s27, 1
      %p118 = scmp.ne.s32.totalorder %s113, %s115
      %p119 = scmp.eq.s32.totalorder %s27, 0
      %p120 = por %p118, %p119
      %p121 = scmp.ne.s32.totalorder %s113, %s115
      %p122 = scmp.eq.s32.totalorder %s32, 1
      %p123 = por %p121, %p122
      %p124 = scmp.ne.s32.totalorder %s115, %s116
      %p125 = scmp.eq.s32.totalorder %s32, 0
      %p126 = por %p124, %p125
      %p127 = scmp.ne.s32.totalorder %s115, %s116
      %p128 = scmp.eq.s32.totalorder %s33, 1
      %p129 = por %p127, %p128
      %p131 = scmp.ne.s32.totalorder %s116, %s130
      %p132 = scmp.eq.s32.totalorder %s33, 0
      %p133 = por %p131, %p132
      %s135 = sadd.s32 %s134, 1
      %p138 = scmp.eq.s32.totalorder %s27, 1
      %p139 = scmp.ne.s32.totalorder %s134, %s136
      %p140 = scmp.eq.s32.totalorder %s27, 0
      %p141 = por %p139, %p140
      %p142 = scmp.ne.s32.totalorder %s134, %s136
      %p143 = scmp.eq.s32.totalorder %s32, 1
      %p144 = por %p142, %p143
      %p145 = scmp.ne.s32.totalorder %s136, %s137
      %p146 = scmp.eq.s32.totalorder %s32, 0
      %p147 = por %p145, %p146
      %p148 = scmp.ne.s32.totalorder %s136, %s137
      %p149 = scmp.eq.s32.totalorder %s33, 1
      %p150 = por %p148, %p149
      %p152 = scmp.ne.s32.totalorder %s137, %s151
      %p153 = scmp.eq.s32.totalorder %s33, 0
      %p154 = por %p152, %p153
      %s156 = sadd.s32 %s155, 1
      %p159 = scmp.eq.s32.totalorder %s27, 1
      %p160 = scmp.ne.s32.totalorder %s155, %s157
      %p161 = scmp.eq.s32.totalorder %s27, 0
      %p162 = por %p160, %p161
      %p163 = scmp.ne.s32.totalorder %s155, %s157
      %p164 = scmp.eq.s32.totalorder %s32, 1
      %p165 = por %p163, %p164
      %p166 = scmp.ne.s32.totalorder %s157, %s158
      %p167 = scmp.eq.s32.totalorder %s32, 0
      %p168 = por %p166, %p167
      %p169 = scmp.ne.s32.totalorder %s157, %s158
      %p170 = scmp.eq.s32.totalorder %s33, 1
      %p171 = por %p169, %p170
      %p173 = scmp.ne.s32.totalorder %s158, %s172
      %p174 = scmp.eq.s32.totalorder %s33, 0
      %p175 = por %p173, %p174
      %s176 = ssub.s32 %s27, %s34
      %p177 = scmp.eq.s32.totalorder %s176, 0
      %s179 = sadd.s32 %s178, 1
      %s180 = scalar_select %p177, %s178, %s179
      %p183 = pneg %p177
      %p184 = scmp.eq.s32.totalorder %s27, 1
      %p185 = por %p183, %p184
      %p186 = scmp.ne.s32.totalorder %s178, %s181
      %p187 = scmp.eq.s32.totalorder %s27, 0
      %p188 = por %p186, %p187
      %p189 = scmp.ne.s32.totalorder %s178, %s181
      %p190 = scmp.eq.s32.totalorder %s32, 1
      %p191 = por %p189, %p190
      %p192 = scmp.ne.s32.totalorder %s181, %s182
      %p193 = scmp.eq.s32.totalorder %s32, 0
      %p194 = por %p192, %p193
      %p195 = scmp.ne.s32.totalorder %s181, %s182
      %p196 = scmp.eq.s32.totalorder %s33, 1
      %p197 = por %p195, %p196
      %p199 = scmp.ne.s32.totalorder %s182, %s198
      %p200 = scmp.eq.s32.totalorder %s33, 0
      %p201 = por %p199, %p200
      %s202 = ssub.s32 %s27, %s34
      %p203 = scmp.eq.s32.totalorder %s202, 0
      %s205 = sadd.s32 %s204, 1
      %s206 = scalar_select %p203, %s204, %s205
      %p209 = pneg %p203
      %p210 = scmp.eq.s32.totalorder %s27, 1
      %p211 = por %p209, %p210
      %p212 = scmp.ne.s32.totalorder %s204, %s207
      %p213 = scmp.eq.s32.totalorder %s27, 0
      %p214 = por %p212, %p213
      %p215 = scmp.ne.s32.totalorder %s204, %s207
      %p216 = scmp.eq.s32.totalorder %s32, 1
      %p217 = por %p215, %p216
      %p218 = scmp.ne.s32.totalorder %s207, %s208
      %p219 = scmp.eq.s32.totalorder %s32, 0
      %p220 = por %p218, %p219
      %p221 = scmp.ne.s32.totalorder %s207, %s208
      %p222 = scmp.eq.s32.totalorder %s33, 1
      %p223 = por %p221, %p222
      %p225 = scmp.ne.s32.totalorder %s208, %s224
      %p226 = scmp.eq.s32.totalorder %s33, 0
      %p227 = por %p225, %p226
      %p228 = scmp.le.s32.totalorder 1, %s27
      %p229 = scmp.lt.s32.totalorder %s27, 3
      %p230 = pnand %p228, %p229
      %p231 = pneg %p230
      // Predicated region
      $region9: #{tpu_custom_call.1} parent=5 // pred_check
        _
      $region10: #{tpu_custom_call.1} parent=5 // pred_check_branch
        %233 = sbr.rel (%p230) target = $region12
      $region11: #{tpu_custom_call.1} parent=5 // pred_region
        %s234 = ssub.s32 %s27, 1
        // Predicated region
        $region13: #{tpu_custom_call.1} parent=11 // pred_check
          %p235 = pneg %p126
        $region14: #{tpu_custom_call.1} parent=11 // pred_check_branch
          %237 = sbr.rel (%p235) target = $region16
        $region15: #{tpu_custom_call.1} parent=11 // pred_region
          %s239 = ssub.s32 256, 256
          %240 = vsyncadd [#allocation6], %s239
          %s241 = sshll.u32 [#allocation7], 4
          %s242 = int_to_ptr.vmem [resolvable:$true] %s241
          %247 = dma.hbm_to_vmem [thread:$0]  %s3, 256, %s242, [#allocation6], 64, 64, 4
        $region16: #{tpu_custom_call.1} parent=11 // pred_fallthru
          _
        // Predicated region
        $region17: #{tpu_custom_call.1} parent=11 // pred_check
          %p248 = pneg %p147
        $region18: #{tpu_custom_call.1} parent=11 // pred_check_branch
          %250 = sbr.rel (%p248) target = $region20
        $region19: #{tpu_custom_call.1} parent=11 // pred_region
          %s252 = ssub.s32 256, 256
          %253 = vsyncadd [#allocation9], %s252
          %s254 = sshll.u32 [#allocation8], 4
          %s255 = int_to_ptr.vmem [resolvable:$true] %s254
          %260 = dma.hbm_to_vmem [thread:$0]  %s4, 256, %s255, [#allocation9], 64, 64, 4
        $region20: #{tpu_custom_call.1} parent=11 // pred_fallthru
          _
        // Predicated region
        $region21: #{tpu_custom_call.1} parent=11 // pred_check
          %p261 = pneg %p168
        $region22: #{tpu_custom_call.1} parent=11 // pred_check_branch
          %263 = sbr.rel (%p261) target = $region24
        $region23: #{tpu_custom_call.1} parent=11 // pred_region
          _
        $region24: #{tpu_custom_call.1} parent=11 // pred_fallthru
          _
      $region12: #{tpu_custom_call.1} parent=5 // pred_fallthru
        _
      %p264 = scmp.lt.s32.totalorder %s27, 2
      // Predicated region
      $region25: #{tpu_custom_call.1} parent=5 // pred_check
        %p265 = pneg %p264
      $region26: #{tpu_custom_call.1} parent=5 // pred_check_branch
        %267 = sbr.rel (%p265) target = $region28
      $region27: #{tpu_custom_call.1} parent=5 // pred_region
        // Predicated region
        $region29: #{tpu_custom_call.1} parent=27 // pred_check
          %p268 = pneg %p47
        $region30: #{tpu_custom_call.1} parent=27 // pred_check_branch
          %270 = sbr.rel (%p268) target = $region32
        $region31: #{tpu_custom_call.1} parent=27 // pred_region
          %s271 = sand.u32 %s37, 1
          %s272 = scalar_lea.sflag [#allocation3], %s271
          %s273 = sand.u32 %s37, 1
          %s274 = smul.addr %s273, 4
          %s275 = scalar_lea.vmem [#allocation2], %s274
          %s277 = ssub.s32 64, 64
          %278 = vsyncadd %s272, %s277
          %s279 = smul.addr %s27, 64
          %s280 = scalar_lea.hbm %s0, %s279
          %s282 = sshll.u32 %s275, 4
          %s283 = int_to_ptr.vmem [resolvable:$true] %s282
          %285 = dma.hbm_to_vmem [thread:$0]  %s280, 64, %s283, %s272
        $region32: #{tpu_custom_call.1} parent=27 // pred_fallthru
          _
        // Predicated region
        $region33: #{tpu_custom_call.1} parent=27 // pred_check
          %p286 = pneg %p73
        $region34: #{tpu_custom_call.1} parent=27 // pred_check_branch
          %288 = sbr.rel (%p286) target = $region36
        $region35: #{tpu_custom_call.1} parent=27 // pred_region
          %s289 = sand.u32 %s27, 1
          %s290 = scalar_lea.sflag [#allocation6], %s289
          %s291 = sand.u32 %s63, 1
          %s292 = smul.addr %s291, 8
          %s293 = scalar_lea.vmem [#allocation5], %s292
          %s295 = ssub.s32 128, 128
          %296 = vsyncadd %s290, %s295
          %s297 = smul.addr %s27, 2
          %s298 = smul.addr %s297, 64
          %s299 = scalar_lea.hbm %s1, %s298
          %s300 = sshll.u32 %s293, 4
          %s301 = int_to_ptr.vmem [resolvable:$true] %s300
          %306 = dma.hbm_to_vmem [thread:$0]  %s299, 128, %s301, %s290, 64, 64, 4
        $region36: #{tpu_custom_call.1} parent=27 // pred_fallthru
          _
        // Predicated region
        $region37: #{tpu_custom_call.1} parent=27 // pred_check
          %p307 = pneg %p99
        $region38: #{tpu_custom_call.1} parent=27 // pred_check_branch
          %309 = sbr.rel (%p307) target = $region40
        $region39: #{tpu_custom_call.1} parent=27 // pred_region
          %p310 = scmp.lt.s32.totalorder %s27, 1
          %s311 = scalar_select %p310, %s27, 1
          %s312 = scalar_lea.vmem %s2, %s311
        $region40: #{tpu_custom_call.1} parent=27 // pred_fallthru
          _
      $region28: #{tpu_custom_call.1} parent=5 // pred_fallthru
        _
      %p313 = scmp.le.s32.totalorder 1, %s27
      %p314 = scmp.lt.s32.totalorder %s27, 3
      %p315 = pnand %p313, %p314
      %p316 = pneg %p315
      // Predicated region
      $region41: #{tpu_custom_call.1} parent=5 // pred_check
        _
      $region42: #{tpu_custom_call.1} parent=5 // pred_check_branch
        %318 = sbr.rel (%p315) target = $region44
      $region43: #{tpu_custom_call.1} parent=5 // pred_region
        %s319 = ssub.s32 %s27, 1
        %s320 = sand.u32 %s40, 1
        %s321 = scalar_lea.sflag [#allocation3], %s320
        %s322 = sand.u32 %s40, 1
        %s323 = smul.addr %s322, 4
        %s324 = scalar_lea.vmem [#allocation2], %s323
        // Predicated region
        $region45: #{tpu_custom_call.1} parent=43 // pred_check
          %p325 = pneg %p53
        $region46: #{tpu_custom_call.1} parent=43 // pred_check_branch
          %327 = sbr.rel (%p325) target = $region48
        $region47: #{tpu_custom_call.1} parent=43 // pred_region
          %328 = dma.done %s321, 64
        $region48: #{tpu_custom_call.1} parent=43 // pred_fallthru
          _
        %s329 = sand.u32 %s32, 1
        %s330 = scalar_lea.sflag [#allocation6], %s329
        %s331 = sand.u32 %s66, 1
        %s332 = smul.addr %s331, 8
        %s333 = scalar_lea.vmem [#allocation5], %s332
        // Predicated region
        $region49: #{tpu_custom_call.1} parent=43 // pred_check
          %p334 = pneg %p79
        $region50: #{tpu_custom_call.1} parent=43 // pred_check_branch
          %336 = sbr.rel (%p334) target = $region52
        $region51: #{tpu_custom_call.1} parent=43 // pred_region
          %337 = dma.done %s330, 128
        $region52: #{tpu_custom_call.1} parent=43 // pred_fallthru
          _
        // Predicated region
        $region53: #{tpu_custom_call.1} parent=43 // pred_check
          %p338 = pneg %p126
        $region54: #{tpu_custom_call.1} parent=43 // pred_check_branch
          %340 = sbr.rel (%p338) target = $region56
        $region55: #{tpu_custom_call.1} parent=43 // pred_region
          %341 = dma.done [#allocation6], 256
        $region56: #{tpu_custom_call.1} parent=43 // pred_fallthru
          _
        // Predicated region
        $region57: #{tpu_custom_call.1} parent=43 // pred_check
          %p342 = pneg %p147
        $region58: #{tpu_custom_call.1} parent=43 // pred_check_branch
          %344 = sbr.rel (%p342) target = $region60
        $region59: #{tpu_custom_call.1} parent=43 // pred_region
          %345 = dma.done [#allocation9], 256
        $region60: #{tpu_custom_call.1} parent=43 // pred_fallthru
          _
        %s346 = sand.u32 %s40, 1
        %s347 = scalar_lea.sflag [#allocation3], %s346
        %s348 = sand.u32 %s40, 1
        %s349 = smul.addr %s348, 4
        %s350 = scalar_lea.vmem [#allocation2], %s349
        %p351 = pneg %p53
        %p352 = pneg %p50
        %s353 = sand.u32 %s32, 1
        %s354 = scalar_lea.sflag [#allocation6], %s353
        %s355 = sand.u32 %s66, 1
        %s356 = smul.addr %s355, 8
        %s357 = scalar_lea.vmem [#allocation5], %s356
        %p358 = pneg %p79
        %p359 = pneg %p76
        %p360 = scmp.lt.s32.totalorder %s32, 1
        %s361 = scalar_select %p360, %s32, 1
        %s362 = scalar_lea.vmem %s2, %s361
        %p363 = pneg %p105
        %p364 = pneg %p102
        %p365 = pneg %p126
        %p366 = pneg %p123
        %p367 = pneg %p147
        %p368 = pneg %p144
        %p369 = pneg %p168
        %p370 = pneg %p165
        %p371 = pneg %p194
        %p372 = pneg %p191
        %s373 = sand.u32 %s181, 1
        %s374 = scalar_lea.sflag [#allocation4], %s373
        %s375 = sand.u32 %s181, 1
        %s376 = smul.addr %s375, 8
        %s377 = scalar_lea.vmem [#allocation10], %s376
        %p378 = pneg %p220
        %p379 = pneg %p217
        %s380 = sand.u32 %s207, 1
        %s381 = scalar_lea.sflag [#allocation12], %s380
        %s382 = sand.u32 %s207, 1
        %s383 = smul.addr %s382, 8
        %s384 = scalar_lea.vmem [#allocation11], %s383
        %p385 = scmp.lt.s32.totalorder %s32, 1
        %s386 = scalar_select %p385, %s32, 1
        %s387 = scalar_lea.vmem %s2, %s386
        %v389 = vld [vmem:[%s324] sm:$0xf]
        %v390 = vld [vmem:[%s333] sm:$0xf]
        %v391 = vld [vmem:[%s333 + $0x4] sm:$0xf]
        %v392 = vld [vmem:[#allocation7] sm:$0xf]
        %v393 = vld [vmem:[#allocation7 + $0x4] sm:$0xf]
        %v394 = vld [vmem:[#allocation7 + $0x8] sm:$0xf]
        %v395 = vld [vmem:[#allocation7 + $0xc] sm:$0xf]
        %v400 = vunpack.c.l.b16 %v392
        %v401 = vunpack.c.l.b16 %v393
        %v402 = vunpack.c.l.b16 %v394
        %v403 = vunpack.c.l.b16 %v395
        %v404 = vpack.c.b16 %v401, %v400
        %v405 = vpack.c.b16 %v403, %v402
        %vm408 = vcmask 261120
        %v410 = vsel %vm408, %v389, 0
        %412 = vmatprep.subr.bf16.mxu0 0
        %413 = vmatpush1.bf16.msra.mxu0 %v404
        %414 = vmatprep.subr.bf16.mxu0 0
        %415 = vmatpush1.bf16.msra.mxu0 %v405
        %416 = vmatprep.subr.bf16.mxu0 0
        %417 = vmatpush1.bf16.msra.mxu0 0
        %418 = vmatprep.subr.bf16.mxu0 0
        %419 = vmatpush1.bf16.msra.mxu0 0
        %420 = vmatprep.subr.bf16.mxu0 0
        %421 = vmatpush1.bf16.msra.mxu0 0
        %422 = vmatprep.subr.bf16.mxu0 0
        %423 = vmatpush1.bf16.msra.mxu0 0
        %424 = vmatprep.subr.bf16.mxu0 0
        %425 = vmatpush1.bf16.msra.mxu0 0
        %426 = vmatprep.subr.bf16.mxu0 0
        %427 = vmatpush1.bf16.msra.mxu0 0
        %428 = vmatprep.subr.bf16.mxu0 0
        %429 = vmatpush1.bf16.msra.mxu0 0
        %430 = vmatprep.subr.bf16.mxu0 0
        %431 = vmatpush1.bf16.msra.mxu0 0
        %432 = vmatprep.subr.bf16.mxu0 0
        %433 = vmatpush1.bf16.msra.mxu0 0
        %434 = vmatprep.subr.bf16.mxu0 0
        %435 = vmatpush1.bf16.msra.mxu0 0
        %436 = vmatprep.subr.bf16.mxu0 0
        %437 = vmatpush1.bf16.msra.mxu0 0
        %438 = vmatprep.subr.bf16.mxu0 0
        %439 = vmatpush1.bf16.msra.mxu0 0
        %440 = vmatprep.subr.bf16.mxu0 0
        %441 = vmatpush1.bf16.msra.mxu0 0
        %442 = vmatprep.subr.bf16.mxu0 0
        %443 = vmatpush1.bf16.msra.mxu0 0
        %444 = vmatprep.mubr.bf16.mxu0 0
        %445 = vmatmul.mubr.bf16.gmra.mrb[0].mxu0 %v410
        %v446 = vpop.f32.mrb[0].mxu0
        %v447 = vadd.f32 0.0, %v446
        %v448 = vpop.f32.mrb[0].mxu0
        %v449 = vpop.f32.mrb[0].mxu0
        %v450 = vpop.f32.mrb[0].mxu0
        %451 = vdwg.mxu0
        %v452 = vpack.c.bf16 %v447, %v447
        %v453 = vld [vmem:[%s387] sm:$0x1]
        %v455 = vlaneseq
        %v456 = vshrl.u32 %v455, 7
        %v457 = vsub.s32 0, %v456
        %v458 = vrot.slane %v453, %v457
        %v462 = vunpack.c.l.b16 %v390
        %v463 = vunpack.c.l.b16 %v391
        %v464 = vpack.c.b16 %v463, %v462
        %v466 = vsel %vm408, %v452, 0
        %v469 = vsel %vm408, %v464, 0
        %471 = vmatprep.subr.bf16.mxu0 0
        %472 = vmatpush1.bf16.xpose.msra.mxu0 %v469
        %473 = vmatprep.subr.bf16.mxu0 0
        %474 = vmatpush1.bf16.xpose.msra.mxu0 0
        %475 = vmatprep.subr.bf16.mxu0 0
        %476 = vmatpush1.bf16.xpose.msra.mxu0 0
        %477 = vmatprep.subr.bf16.mxu0 0
        %478 = vmatpush1.bf16.xpose.msra.mxu0 0
        %479 = vmatprep.subr.bf16.mxu0 0
        %480 = vmatpush1.bf16.xpose.msra.mxu0 0
        %481 = vmatprep.subr.bf16.mxu0 0
        %482 = vmatpush1.bf16.xpose.msra.mxu0 0
        %483 = vmatprep.subr.bf16.mxu0 0
        %484 = vmatpush1.bf16.xpose.msra.mxu0 0
        %485 = vmatprep.subr.bf16.mxu0 0
        %486 = vmatpush1.bf16.xpose.msra.mxu0 0
        %487 = vmatprep.subr.bf16.mxu0 0
        %488 = vmatpush1.bf16.xpose.msra.mxu0 0
        %489 = vmatprep.subr.bf16.mxu0 0
        %490 = vmatpush1.bf16.xpose.msra.mxu0 0
        %491 = vmatprep.subr.bf16.mxu0 0
        %492 = vmatpush1.bf16.xpose.msra.mxu0 0
        %493 = vmatprep.subr.bf16.mxu0 0
        %494 = vmatpush1.bf16.xpose.msra.mxu0 0
        %495 = vmatprep.subr.bf16.mxu0 0
        %496 = vmatpush1.bf16.xpose.msra.mxu0 0
        %497 = vmatprep.subr.bf16.mxu0 0
        %498 = vmatpush1.bf16.xpose.msra.mxu0 0
        %499 = vmatprep.subr.bf16.mxu0 0
        %500 = vmatpush1.bf16.xpose.msra.mxu0 0
        %501 = vmatprep.subr.bf16.mxu0 0
        %502 = vmatpush1.bf16.xpose.msra.mxu0 0
        %503 = vmatprep.mubr.bf16.mxu0 0
        %504 = vmatmul.mubr.bf16.gmra.mrb[0].mxu0 %v466
        %v505 = vpop.f32.mrb[0].mxu0
        %v506 = vadd.f32 %v458, %v505
        %v507 = vpop.f32.mrb[0].mxu0
        %v508 = vpop.f32.mrb[0].mxu0
        %v509 = vpop.f32.mrb[0].mxu0
        %510 = vdwg.mxu0
        %vm511 = vcmask 130048
        %v512 = vsel %vm511, %v506, -inf
        %513 = vmax.xlane.f32.xlu0 %v512
        %v514 = vpop.xlane.xlu0 %513
        %v515 = vsub.f32 %v506, %v514
        %v516 = vmul.f32 %v515, 1.442695
        %v517 = vpow.pop %v516
        %v518 = vsel %vm511, %v517, 0.0
        %519 = vadd.xlane.f32.xlu0 %v518
        %v520 = vpop.xlane.xlu0 %519
        %v521 = vrcp.pop %v520
        %v522 = vmul.f32 %v517, %v521
        %523 = vst.msk [vmem:[%s384] sm:$0xff] %vm511, %v522
        %v524 = vpack.c.bf16 %v522, %v522
        %v527 = vsel %vm511, %v524, 0
        %529 = vmatprep.subr.bf16.mxu0 0
        %530 = vmatpush1.bf16.msra.mxu0 %v464
        %531 = vmatprep.subr.bf16.mxu0 0
        %532 = vmatpush1.bf16.msra.mxu0 0
        %533 = vmatprep.subr.bf16.mxu0 0
        %534 = vmatpush1.bf16.msra.mxu0 0
        %535 = vmatprep.subr.bf16.mxu0 0
        %536 = vmatpush1.bf16.msra.mxu0 0
        %537 = vmatprep.subr.bf16.mxu0 0
        %538 = vmatpush1.bf16.msra.mxu0 0
        %539 = vmatprep.subr.bf16.mxu0 0
        %540 = vmatpush1.bf16.msra.mxu0 0
        %541 = vmatprep.subr.bf16.mxu0 0
        %542 = vmatpush1.bf16.msra.mxu0 0
        %543 = vmatprep.subr.bf16.mxu0 0
        %544 = vmatpush1.bf16.msra.mxu0 0
        %545 = vmatprep.subr.bf16.mxu0 0
        %546 = vmatpush1.bf16.msra.mxu0 0
        %547 = vmatprep.subr.bf16.mxu0 0
        %548 = vmatpush1.bf16.msra.mxu0 0
        %549 = vmatprep.subr.bf16.mxu0 0
        %550 = vmatpush1.bf16.msra.mxu0 0
        %551 = vmatprep.subr.bf16.mxu0 0
        %552 = vmatpush1.bf16.msra.mxu0 0
        %553 = vmatprep.subr.bf16.mxu0 0
        %554 = vmatpush1.bf16.msra.mxu0 0
        %555 = vmatprep.subr.bf16.mxu0 0
        %556 = vmatpush1.bf16.msra.mxu0 0
        %557 = vmatprep.subr.bf16.mxu0 0
        %558 = vmatpush1.bf16.msra.mxu0 0
        %559 = vmatprep.subr.bf16.mxu0 0
        %560 = vmatpush1.bf16.msra.mxu0 0
        %561 = vmatprep.mubr.bf16.mxu0 0
        %562 = vmatmul.mubr.bf16.gmra.mrb[0].mxu0 %v527
        %v563 = vpop.f32.mrb[0].mxu0
        %v564 = vadd.f32 0.0, %v563
        %v565 = vpop.f32.mrb[0].mxu0
        %v566 = vpop.f32.mrb[0].mxu0
        %v567 = vpop.f32.mrb[0].mxu0
        %568 = vdwg.mxu0
        %v569 = vpack.c.bf16 %v564, %v564
        %v570 = vld [vmem:[#allocation8] sm:$0xf]
        %v571 = vld [vmem:[#allocation8 + $0x4] sm:$0xf]
        %v572 = vld [vmem:[#allocation8 + $0x8] sm:$0xf]
        %v573 = vld [vmem:[#allocation8 + $0xc] sm:$0xf]
        %v574 = vld [vmem:[%s5] sm:$0xf]
        %v575 = vld [vmem:[%s5 + $0x4] sm:$0xf]
        %v576 = vld [vmem:[%s5 + $0x8] sm:$0xf]
        %v577 = vld [vmem:[%s5 + $0xc] sm:$0xf]
        %v582 = vunpack.c.l.b16 %v574
        %v583 = vunpack.c.l.b16 %v575
        %v584 = vunpack.c.l.b16 %v576
        %v585 = vunpack.c.l.b16 %v577
        %v586 = vpack.c.b16 %v583, %v582
        %v587 = vpack.c.b16 %v585, %v584
        %590 = vmatprep.subr.bf16.mxu0 0
        %591 = vmatpush1.bf16.msra.mxu0 %v586
        %592 = vmatprep.subr.bf16.mxu0 0
        %593 = vmatpush1.bf16.msra.mxu0 %v587
        %594 = vmatprep.subr.bf16.mxu0 0
        %595 = vmatpush1.bf16.msra.mxu0 0
        %596 = vmatprep.subr.bf16.mxu0 0
        %597 = vmatpush1.bf16.msra.mxu0 0
        %598 = vmatprep.subr.bf16.mxu0 0
        %599 = vmatpush1.bf16.msra.mxu0 0
        %600 = vmatprep.subr.bf16.mxu0 0
        %601 = vmatpush1.bf16.msra.mxu0 0
        %602 = vmatprep.subr.bf16.mxu0 0
        %603 = vmatpush1.bf16.msra.mxu0 0
        %604 = vmatprep.subr.bf16.mxu0 0
        %605 = vmatpush1.bf16.msra.mxu0 0
        %606 = vmatprep.subr.bf16.mxu0 0
        %607 = vmatpush1.bf16.msra.mxu0 0
        %608 = vmatprep.subr.bf16.mxu0 0
        %609 = vmatpush1.bf16.msra.mxu0 0
        %610 = vmatprep.subr.bf16.mxu0 0
        %611 = vmatpush1.bf16.msra.mxu0 0
        %612 = vmatprep.subr.bf16.mxu0 0
        %613 = vmatpush1.bf16.msra.mxu0 0
        %614 = vmatprep.subr.bf16.mxu0 0
        %615 = vmatpush1.bf16.msra.mxu0 0
        %616 = vmatprep.subr.bf16.mxu0 0
        %617 = vmatpush1.bf16.msra.mxu0 0
        %618 = vmatprep.subr.bf16.mxu0 0
        %619 = vmatpush1.bf16.msra.mxu0 0
        %620 = vmatprep.subr.bf16.mxu0 0
        %621 = vmatpush1.bf16.msra.mxu0 0
        %622 = vmatprep.mubr.bf16.mxu0 0
        %623 = vmatmul.mubr.bf16.gmra.mrb[0].mxu0 %v410
        %v624 = vpop.f32.mrb[0].mxu0
        %v625 = vadd.f32 0.0, %v624
        %v626 = vpop.f32.mrb[0].mxu0
        %v627 = vpop.f32.mrb[0].mxu0
        %v628 = vpop.f32.mrb[0].mxu0
        %629 = vdwg.mxu0
        %v634 = vunpack.c.l.b16 %v570
        %v635 = vunpack.c.l.b16 %v571
        %v636 = vunpack.c.l.b16 %v572
        %v637 = vunpack.c.l.b16 %v573
        %v638 = vpack.c.b16 %v635, %v634
        %v639 = vpack.c.b16 %v637, %v636
        %v643 = vsel %vm408, %v569, 0
        %645 = vmatprep.subr.bf16.mxu0 0
        %646 = vmatpush1.bf16.msra.mxu0 %v638
        %647 = vmatprep.subr.bf16.mxu0 0
        %648 = vmatpush1.bf16.msra.mxu0 %v639
        %649 = vmatprep.subr.bf16.mxu0 0
        %650 = vmatpush1.bf16.msra.mxu0 0
        %651 = vmatprep.subr.bf16.mxu0 0
        %652 = vmatpush1.bf16.msra.mxu0 0
        %653 = vmatprep.subr.bf16.mxu0 0
        %654 = vmatpush1.bf16.msra.mxu0 0
        %655 = vmatprep.subr.bf16.mxu0 0
        %656 = vmatpush1.bf16.msra.mxu0 0
        %657 = vmatprep.subr.bf16.mxu0 0
        %658 = vmatpush1.bf16.msra.mxu0 0
        %659 = vmatprep.subr.bf16.mxu0 0
        %660 = vmatpush1.bf16.msra.mxu0 0
        %661 = vmatprep.subr.bf16.mxu0 0
        %662 = vmatpush1.bf16.msra.mxu0 0
        %663 = vmatprep.subr.bf16.mxu0 0
        %664 = vmatpush1.bf16.msra.mxu0 0
        %665 = vmatprep.subr.bf16.mxu0 0
        %666 = vmatpush1.bf16.msra.mxu0 0
        %667 = vmatprep.subr.bf16.mxu0 0
        %668 = vmatpush1.bf16.msra.mxu0 0
        %669 = vmatprep.subr.bf16.mxu0 0
        %670 = vmatpush1.bf16.msra.mxu0 0
        %671 = vmatprep.subr.bf16.mxu0 0
        %672 = vmatpush1.bf16.msra.mxu0 0
        %673 = vmatprep.subr.bf16.mxu0 0
        %674 = vmatpush1.bf16.msra.mxu0 0
        %675 = vmatprep.subr.bf16.mxu0 0
        %676 = vmatpush1.bf16.msra.mxu0 0
        %677 = vmatprep.mubr.bf16.mxu0 0
        %678 = vmatmul.mubr.bf16.gmra.mrb[0].mxu0 %v643
        %v679 = vpop.f32.mrb[0].mxu0
        %v680 = vadd.f32 %v625, %v679
        %v681 = vpop.f32.mrb[0].mxu0
        %v682 = vpop.f32.mrb[0].mxu0
        %v683 = vpop.f32.mrb[0].mxu0
        %684 = vdwg.mxu0
        %v685 = vtanh.pop %v680
        %686 = vst.msk [vmem:[%s377] sm:$0xff] %vm408, %v685
        %s687 = sand.u32 %s181, 1
        %s688 = scalar_lea.sflag [#allocation4], %s687
        %s689 = sand.u32 %s181, 1
        %s690 = smul.addr %s689, 8
        %s691 = scalar_lea.vmem [#allocation10], %s690
        %s692 = sand.u32 %s207, 1
        %s693 = scalar_lea.sflag [#allocation12], %s692
        %s694 = sand.u32 %s207, 1
        %s695 = smul.addr %s694, 8
        %s696 = scalar_lea.vmem [#allocation11], %s695
        // Predicated region
        $region61: #{tpu_custom_call.1} parent=43 // pred_check
          %p697 = pneg %p191
        $region62: #{tpu_custom_call.1} parent=43 // pred_check_branch
          %699 = sbr.rel (%p697) target = $region64
        $region63: #{tpu_custom_call.1} parent=43 // pred_region
          %s701 = ssub.s32 128, 128
          %702 = vsyncadd %s688, %s701
          %s703 = smul.addr %s32, 128
          %s704 = scalar_lea.hbm %s6, %s703
          %s706 = sshll.u32 %s691, 4
          %s707 = int_to_ptr.vmem [resolvable:$true] %s706
          %709 = dma.vmem_to_hbm [thread:$0]  %s707, 128, %s704, %s688
        $region64: #{tpu_custom_call.1} parent=43 // pred_fallthru
          _
        // Predicated region
        $region65: #{tpu_custom_call.1} parent=43 // pred_check
          %p710 = pneg %p217
        $region66: #{tpu_custom_call.1} parent=43 // pred_check_branch
          %712 = sbr.rel (%p710) target = $region68
        $region67: #{tpu_custom_call.1} parent=43 // pred_region
          %s714 = ssub.s32 128, 128
          %715 = vsyncadd %s693, %s714
          %s716 = smul.addr %s32, 128
          %s717 = scalar_lea.hbm %s7, %s716
          %s719 = sshll.u32 %s696, 4
          %s720 = int_to_ptr.vmem [resolvable:$true] %s719
          %722 = dma.vmem_to_hbm [thread:$0]  %s720, 128, %s717, %s693
        $region68: #{tpu_custom_call.1} parent=43 // pred_fallthru
          _
      $region44: #{tpu_custom_call.1} parent=5 // pred_fallthru
        _
      %p723 = scmp.le.s32.totalorder 2, %s27
      // Predicated region
      $region69: #{tpu_custom_call.1} parent=5 // pred_check
        %p724 = pneg %p723
      $region70: #{tpu_custom_call.1} parent=5 // pred_check_branch
        %726 = sbr.rel (%p724) target = $region72
      $region71: #{tpu_custom_call.1} parent=5 // pred_region
        %s727 = ssub.s32 %s27, 2
        // Predicated region
        $region73: #{tpu_custom_call.1} parent=71 // pred_check
          %p728 = pneg %p197
        $region74: #{tpu_custom_call.1} parent=71 // pred_check_branch
          %730 = sbr.rel (%p728) target = $region76
        $region75: #{tpu_custom_call.1} parent=71 // pred_region
          %s731 = sand.u32 %s182, 1
          %s732 = scalar_lea.sflag [#allocation4], %s731
          %s733 = sand.u32 %s182, 1
          %s734 = smul.addr %s733, 8
          %s735 = scalar_lea.vmem [#allocation10], %s734
          %736 = dma.done %s732, 128
        $region76: #{tpu_custom_call.1} parent=71 // pred_fallthru
          _
        // Predicated region
        $region77: #{tpu_custom_call.1} parent=71 // pred_check
          %p737 = pneg %p223
        $region78: #{tpu_custom_call.1} parent=71 // pred_check_branch
          %739 = sbr.rel (%p737) target = $region80
        $region79: #{tpu_custom_call.1} parent=71 // pred_region
          %s740 = sand.u32 %s208, 1
          %s741 = scalar_lea.sflag [#allocation12], %s740
          %s742 = sand.u32 %s208, 1
          %s743 = smul.addr %s742, 8
          %s744 = scalar_lea.vmem [#allocation11], %s743
          %745 = dma.done %s741, 128
        $region80: #{tpu_custom_call.1} parent=71 // pred_fallthru
          _
      $region72: #{tpu_custom_call.1} parent=5 // pred_fallthru
        _
    $region6: #{tpu_custom_call.1} parent=1 // loop_footer
      %s31 = sadd.s32 1, %s27
    $region7: #{tpu_custom_call.1} parent=1 // loop_footer_branch
      %26 = sbr.rel target = $region3
    $region8: #{tpu_custom_call.1} parent=1 // loop_exit
      _
    %746 = vsyncpa [#allocation3], 1
    %s747 = scalar_lea.sflag [#allocation3], 1
    %748 = vsyncpa %s747, 1
    %749 = vsyncpa [#allocation6], 1
    %s750 = scalar_lea.sflag [#allocation6], 1
    %751 = vsyncpa %s750, 1
    %752 = vsyncpa [#allocation9], 1
    %753 = vsyncpa [#allocation4], 1
    %s754 = scalar_lea.sflag [#allocation4], 1
    %755 = vsyncpa %s754, 1
    %756 = vsyncpa [#allocation12], 1
    %s757 = scalar_lea.sflag [#allocation12], 1
    %758 = vsyncpa %s757, 1

</llo_original>
